<compile_context>
chip_gen: v7x
topology: tpu7x:2x2x1
jax: 0.10.0
libtpu: 0.0.40
codegen_flags: <defaults>
</compile_context>

<pallas_src>
import functools

import jax
import jax.numpy as jnp
import numpy as np
from jax.experimental import pallas as pl
from jax.experimental.pallas import tpu as pltpu

_RRELU_SLOPE = (1.0 / 8.0 + 1.0 / 3.0) / 2.0  # F.rrelu eval-mode negative slope


def _fused_kernel(xbig_ref, wihB_ref, whhB_ref, bB_ref, mask_ref, sel_ref,
                  w1_ref, b1_ref, w2_ref, b2_ref, w3a_ref, w3b_ref, b3_ref,
                  o_ref, hseq_ref, *, seq_len):
    """Whole RTRNNBlock forward (eval mode) in one kernel, everything in VMEM.

    xbig_ref: (L, G*I)   per-timestep inputs of all G RNNs, feature-concatenated
    wihB_ref: (G*I, HP)  block-diagonal W_ih^T (HP = G*H padded to 128-mult)
    whhB_ref: (HP, HP)   block-diagonal W_hh^T
    bB_ref  : (1, HP)    b_ih + b_hh per group
    mask_ref: (1, HP)    1.0 -> relu group, 0.0 -> tanh group / padding
    sel_ref : (HP, 2H)   sums relu groups into [:, :H], copies tanh into [:, H:]
    hseq_ref: (L, HP)    VMEM scratch for the hidden-state sequence
    o_ref   : (L, O)     final FCN output
    """
    mask = mask_ref[...]
    whhB = whhB_ref[...]

    # Input projection for every RNN and every timestep in a single matmul.
    pre = (jnp.dot(xbig_ref[...], wihB_ref[...],
                   preferred_element_type=jnp.float32) + bB_ref[...])   # (L, HP)

    def act(z):
        # relu for the randomized RNNs, tanh for rnn_orig (padding lanes stay 0).
        return jnp.where(mask > 0.5, jnp.maximum(z, 0.0), jnp.tanh(z))

    # t == 0: previous hidden state is zero -> skip the h @ W_hh matmul.
    h = act(pre[0:1, :])
    hseq_ref[0:1, :] = h
    for t in range(1, seq_len):          # static unroll; L is small & known
        h = act(pre[t:t + 1, :]
                + jnp.dot(h, whhB, preferred_element_type=jnp.float32))
        hseq_ref[t:t + 1, :] = h

    # Group reduction on the MXU: relu groups summed, tanh group selected.
    out_r = jnp.dot(hseq_ref[...], sel_ref[...],
                    preferred_element_type=jnp.float32)                 # (L, 2H)

    # FCN (eval mode: dropout1/dropout2 = identity, rrelu = fixed mean slope).
    out1 = (jnp.dot(out_r, w1_ref[...], preferred_element_type=jnp.float32)
            + b1_ref[...])
    out1 = jnp.where(out1 >= 0.0, out1, out1 * _RRELU_SLOPE)
    out2 = jnp.tanh(jnp.dot(out1, w2_ref[...],
                            preferred_element_type=jnp.float32) + b2_ref[...])
    # fc3 on cat([out1, out2]) == out1 @ W3a + out2 @ W3b
    o_ref[...] = (jnp.dot(out1, w3a_ref[...], preferred_element_type=jnp.float32)
                  + jnp.dot(out2, w3b_ref[...], preferred_element_type=jnp.float32)
                  + b3_ref[...])


class RTRNNBlockPallas:
    """Deterministically-initialized JAX/Pallas port of RTRNNBlock (eval mode)."""

    def __init__(self, key, input_size, hidden_size, output_size,
                 num_layers=1, dropout_prob=0.1, window_size=10, fcn_fanout=16):
        assert num_layers == 1, "only num_layers=1 is supported"
        self.hidden_size = hidden_size
        self.input_size = input_size
        self.output_size = output_size
        self.num_rnns = (window_size // 2 if window_size % 2 == 0
                         else (window_size + 1) // 2)
        H, I, O, F, R = hidden_size, input_size, output_size, fcn_fanout, self.num_rnns
        G = R + 1                                   # relu RNNs + tanh rnn_orig
        self.num_groups = G
        # Fused hidden width padded to a lane-dense multiple of 128.
        self.hp = ((G * H + 127) // 128) * 128

        def u(k, shape, fan_in):
            b = 1.0 / float(np.sqrt(fan_in))
            return jax.random.uniform(k, shape, jnp.float32, -b, b)

        ks = iter(jax.random.split(key, 4 * R + 10))
        # relu RNNs
        self.wih = jnp.stack([u(next(ks), (H, I), H) for _ in range(R)])
        self.whh = jnp.stack([u(next(ks), (H, H), H) for _ in range(R)])
        self.bih = jnp.stack([u(next(ks), (H,), H) for _ in range(R)])
        self.bhh = jnp.stack([u(next(ks), (H,), H) for _ in range(R)])
        # tanh RNN (rnn_orig)
        self.wih_o = u(next(ks), (H, I), H)
        self.whh_o = u(next(ks), (H, H), H)
        self.bih_o = u(next(ks), (H,), H)
        self.bhh_o = u(next(ks), (H,), H)
        # FCN
        self.w1 = u(next(ks), (H * F, 2 * H), 2 * H)
        self.b1 = u(next(ks), (H * F,), 2 * H)
        self.w2 = u(next(ks), (H, H * F), H * F)
        self.b2 = u(next(ks), (H,), H * F)
        self.w3 = u(next(ks), (O, H * (F + 1)), H * (F + 1))
        self.b3 = u(next(ks), (O,), H * (F + 1))

        # --- fused / padded kernel-layout parameters -----------------------
        HP = self.hp
        wih_all = np.concatenate([np.asarray(self.wih),
                                  np.asarray(self.wih_o)[None]], axis=0)   # (G,H,I)
        whh_all = np.concatenate([np.asarray(self.whh),
                                  np.asarray(self.whh_o)[None]], axis=0)   # (G,H,H)
        b_all = np.concatenate([np.asarray(self.bih + self.bhh),
                                np.asarray(self.bih_o + self.bhh_o)[None]], axis=0)
        wih_big = np.zeros((G * I, HP), np.float32)
        whh_big = np.zeros((HP, HP), np.float32)
        b_big = np.zeros((1, HP), np.float32)
        relu_mask = np.zeros((1, HP), np.float32)
        sel = np.zeros((HP, 2 * H), np.float32)
        eye = np.eye(H, dtype=np.float32)
        for g in range(G):
            wih_big[g * I:(g + 1) * I, g * H:(g + 1) * H] = wih_all[g].T
            whh_big[g * H:(g + 1) * H, g * H:(g + 1) * H] = whh_all[g].T
            b_big[0, g * H:(g + 1) * H] = b_all[g]
            if g < R:
                relu_mask[0, g * H:(g + 1) * H] = 1.0
                sel[g * H:(g + 1) * H, :H] = eye
            else:
                sel[g * H:(g + 1) * H, H:] = eye
        self.wih_big = jnp.asarray(wih_big)
        self.whh_big = jnp.asarray(whh_big)
        self.b_big = jnp.asarray(b_big)
        self.relu_mask = jnp.asarray(relu_mask)
        self.sel = jnp.asarray(sel)
        # TODO(synk): weights could be cast to bf16 for the v6e/v7x MXU; kept
        # f32 so the kernel matches the f32 reference (workload is latency-bound).
        self.w1t = self.w1.T                                   # (2H, H*F)
        self.b1r = self.b1[None, :]
        self.w2t = self.w2.T                                   # (H*F, H)
        self.b2r = self.b2[None, :]
        w3t = self.w3.T                                        # (H*(F+1), O)
        self.w3at = w3t[:H * F]
        self.w3bt = w3t[H * F:]
        self.b3r = self.b3[None, :]

        self._forward_jit = jax.jit(self._forward_impl)

    # ------------------------------------------------------------------ #
    def select_indices(self, perm_key, batch):
        """torch.randperm(N)[-1] analogue per relu RNN (+ N-1 for rnn_orig).

        Fully traced -- no device->host sync.  (Indices will not bitwise match
        torch.randperm for the same seed; the distribution is equivalent.)
        """
        keys = jax.random.split(perm_key, self.num_rnns)
        idx = jnp.stack([jax.random.permutation(keys[r], batch)[-1]
                         for r in range(self.num_rnns)]).astype(jnp.int32)
        return jnp.concatenate([idx, jnp.array([batch - 1], jnp.int32)])

    def _forward_impl(self, x, perm_key):
        L, N, I = x.shape
        G = self.num_groups
        idxs = self.select_indices(perm_key, N)                 # (G,) on device
        x_sel = jnp.take(x, idxs, axis=1)                       # (L, G, I)
        x_big = x_sel.reshape(L, G * I)                         # (L, G*I)
        kernel = functools.partial(_fused_kernel, seq_len=L)
        return pl.pallas_call(
            kernel,
            out_shape=jax.ShapeDtypeStruct((L, self.output_size), jnp.float32),
            scratch_shapes=[pltpu.VMEM((L, self.hp), jnp.float32)],
        )(x_big, self.wih_big, self.whh_big, self.b_big, self.relu_mask,
          self.sel, self.w1t, self.b1r, self.w2t, self.b2r,
          self.w3at, self.w3bt, self.b3r)

    def forward(self, x, perm_key):
        return self._forward_jit(x, perm_key)


def reference_forward(model, x, idxs):
    """Pure-JAX reference mirroring the PyTorch forward (eval mode)."""
    def run_rnn(xs, wih, whh, bih, bhh, act):
        h = jnp.zeros((model.hidden_size,), jnp.float32)
        outs = []
        for t in range(xs.shape[0]):
            h = act(xs[t] @ wih.T + bih + h @ whh.T + bhh)
            outs.append(h)
        return jnp.stack(outs)                                  # (L, H)

    out_sum = sum(run_rnn(x[:, idxs[k], :], model.wih[k], model.whh[k],
                          model.bih[k], model.bhh[k], jax.nn.relu)
                  for k in range(model.num_rnns))
    out_orig = run_rnn(x[:, -1, :], model.wih_o, model.whh_o,
                       model.bih_o, model.bhh_o, jnp.tanh)
    out_r = jnp.concatenate([out_sum, out_orig], axis=1)
    out1 = out_r @ model.w1.T + model.b1
    out1 = jnp.where(out1 >= 0, out1, out1 * _RRELU_SLOPE)
    out2 = jnp.tanh(out1 @ model.w2.T + model.b2)
    out3 = jnp.concatenate([out1, out2], axis=1) @ model.w3.T + model.b3
    return out3


if __name__ == "__main__":
    key = jax.random.PRNGKey(0)
    k_param, k_x, k_perm = jax.random.split(key, 3)

    input_size, hidden_size, output_size = 8, 32, 16
    seq_len, batch = 8, 4                                   # x: (L, N, I)

    model = RTRNNBlockPallas(k_param, input_size, hidden_size, output_size,
                             num_layers=1, window_size=10, fcn_fanout=16)
    x = jax.random.normal(k_x, (seq_len, batch, input_size), jnp.float32)

    out = jax.block_until_ready(model.forward(x, k_perm))
    assert out.shape == (seq_len, output_size)

    # Reference uses the same (deterministic) index draw; host conversion here
    # is test glue only, not part of the forward path.
    idxs = [int(i) for i in
            np.asarray(model.select_indices(k_perm, batch))[:model.num_rnns]]
    ref = reference_forward(model, x, idxs)
    np.testing.assert_allclose(np.asarray(out), np.asarray(ref),
                               rtol=5e-2, atol=5e-2)
    print("KERNEL_OK")
</pallas_src>

<mosaic_0001>
module attributes {stable_mosaic.version = 11 : i64} {
  func.func @_fused_kernel(%arg0: memref<8x48xf32, #tpu.memory_space<vmem>>, %arg1: memref<48x256xf32, #tpu.memory_space<vmem>>, %arg2: memref<256x256xf32, #tpu.memory_space<vmem>>, %arg3: memref<1x256xf32, #tpu.memory_space<vmem>>, %arg4: memref<1x256xf32, #tpu.memory_space<vmem>>, %arg5: memref<256x64xf32, #tpu.memory_space<vmem>>, %arg6: memref<64x512xf32, #tpu.memory_space<vmem>>, %arg7: memref<1x512xf32, #tpu.memory_space<vmem>>, %arg8: memref<512x32xf32, #tpu.memory_space<vmem>>, %arg9: memref<1x32xf32, #tpu.memory_space<vmem>>, %arg10: memref<512x16xf32, #tpu.memory_space<vmem>>, %arg11: memref<32x16xf32, #tpu.memory_space<vmem>>, %arg12: memref<1x16xf32, #tpu.memory_space<vmem>>, %arg13: memref<8x16xf32, #tpu.memory_space<vmem>>, %arg14: memref<8x256xf32, #tpu.memory_space<vmem>>) attributes {dimension_semantics = [], scalar_prefetch = 0 : i64, scratch_operands = 1 : i64, tpu.core_type = #tpu.core_type<tc>} {
    %c0 = arith.constant 0 : index
    %c0_0 = arith.constant 0 : index
    %0 = vector.load %arg4[%c0, %c0_0] : memref<1x256xf32, #tpu.memory_space<vmem>>, vector<1x256xf32>
    %c0_1 = arith.constant 0 : index
    %c0_2 = arith.constant 0 : index
    %1 = vector.load %arg2[%c0_1, %c0_2] : memref<256x256xf32, #tpu.memory_space<vmem>>, vector<256x256xf32>
    %c0_3 = arith.constant 0 : index
    %c0_4 = arith.constant 0 : index
    %2 = vector.load %arg0[%c0_3, %c0_4] : memref<8x48xf32, #tpu.memory_space<vmem>>, vector<8x48xf32>
    %c0_5 = arith.constant 0 : index
    %c0_6 = arith.constant 0 : index
    %3 = vector.load %arg1[%c0_5, %c0_6] : memref<48x256xf32, #tpu.memory_space<vmem>>, vector<48x256xf32>
    %cst = arith.constant dense<0.000000e+00> : vector<8x256xf32>
    %4 = tpu.matmul %2, %3, %cst {dimension_numbers = #tpu.dot_dimension_numbers<[1], [0], [0], [1], [0, 0, 1, 1], [], []>} : vector<8x48xf32>, vector<48x256xf32>, vector<8x256xf32> -> vector<8x256xf32>
    %c0_7 = arith.constant 0 : index
    %c0_8 = arith.constant 0 : index
    %5 = vector.load %arg3[%c0_7, %c0_8] : memref<1x256xf32, #tpu.memory_space<vmem>>, vector<1x256xf32>
    %6 = vector.broadcast %5 : vector<1x256xf32> to vector<8x256xf32>
    %7 = arith.addf %4, %6 : vector<8x256xf32>
    %8 = vector.extract_strided_slice %7 {offsets = [0, 0], sizes = [1, 256], strides = [1, 1]} : vector<8x256xf32> to vector<1x256xf32>
    %cst_9 = arith.constant 5.000000e-01 : f32
    %9 = vector.broadcast %cst_9 : f32 to vector<1x256xf32>
    %10 = arith.cmpf ogt, %0, %9 : vector<1x256xf32>
    %cst_10 = arith.constant 0.000000e+00 : f32
    %11 = vector.broadcast %cst_10 : f32 to vector<1x256xf32>
    %12 = arith.maximumf %8, %11 : vector<1x256xf32>
    %13 = math.tanh %8 : vector<1x256xf32>
    %14 = arith.select %10, %12, %13 : vector<1x256xi1>, vector<1x256xf32>
    %c0_11 = arith.constant 0 : index
    %c0_12 = arith.constant 0 : index
    %15 = vector.load %arg14[%c0_11, %c0_12] : memref<8x256xf32, #tpu.memory_space<vmem>>, vector<1x256xf32>
    tpu.vector_store %arg14[%c0_11, %c0_12], %14 {strides = array<i32>} : memref<8x256xf32, #tpu.memory_space<vmem>>, vector<1x256xf32>,
    %16 = vector.extract_strided_slice %7 {offsets = [1, 0], sizes = [1, 256], strides = [1, 1]} : vector<8x256xf32> to vector<1x256xf32>
    %cst_13 = arith.constant dense<0.000000e+00> : vector<1x256xf32>
    %17 = tpu.matmul %14, %1, %cst_13 {dimension_numbers = #tpu.dot_dimension_numbers<[1], [0], [0], [1], [0, 0, 1, 1], [], []>} : vector<1x256xf32>, vector<256x256xf32>, vector<1x256xf32> -> vector<1x256xf32>
    %18 = arith.addf %16, %17 : vector<1x256xf32>
    %cst_14 = arith.constant 5.000000e-01 : f32
    %19 = vector.broadcast %cst_14 : f32 to vector<1x256xf32>
    %20 = arith.cmpf ogt, %0, %19 : vector<1x256xf32>
    %cst_15 = arith.constant 0.000000e+00 : f32
    %21 = vector.broadcast %cst_15 : f32 to vector<1x256xf32>
    %22 = arith.maximumf %18, %21 : vector<1x256xf32>
    %23 = math.tanh %18 : vector<1x256xf32>
    %24 = arith.select %20, %22, %23 : vector<1x256xi1>, vector<1x256xf32>
    %c1 = arith.constant 1 : index
    %c0_16 = arith.constant 0 : index
    %25 = vector.load %arg14[%c1, %c0_16] : memref<8x256xf32, #tpu.memory_space<vmem>>, vector<1x256xf32>
    tpu.vector_store %arg14[%c1, %c0_16], %24 {strides = array<i32>} : memref<8x256xf32, #tpu.memory_space<vmem>>, vector<1x256xf32>,
    %26 = vector.extract_strided_slice %7 {offsets = [2, 0], sizes = [1, 256], strides = [1, 1]} : vector<8x256xf32> to vector<1x256xf32>
    %cst_17 = arith.constant dense<0.000000e+00> : vector<1x256xf32>
    %27 = tpu.matmul %24, %1, %cst_17 {dimension_numbers = #tpu.dot_dimension_numbers<[1], [0], [0], [1], [0, 0, 1, 1], [], []>} : vector<1x256xf32>, vector<256x256xf32>, vector<1x256xf32> -> vector<1x256xf32>
    %28 = arith.addf %26, %27 : vector<1x256xf32>
    %cst_18 = arith.constant 5.000000e-01 : f32
    %29 = vector.broadcast %cst_18 : f32 to vector<1x256xf32>
    %30 = arith.cmpf ogt, %0, %29 : vector<1x256xf32>
    %cst_19 = arith.constant 0.000000e+00 : f32
    %31 = vector.broadcast %cst_19 : f32 to vector<1x256xf32>
    %32 = arith.maximumf %28, %31 : vector<1x256xf32>
    %33 = math.tanh %28 : vector<1x256xf32>
    %34 = arith.select %30, %32, %33 : vector<1x256xi1>, vector<1x256xf32>
    %c2 = arith.constant 2 : index
    %c0_20 = arith.constant 0 : index
    %35 = vector.load %arg14[%c2, %c0_20] : memref<8x256xf32, #tpu.memory_space<vmem>>, vector<1x256xf32>
    tpu.vector_store %arg14[%c2, %c0_20], %34 {strides = array<i32>} : memref<8x256xf32, #tpu.memory_space<vmem>>, vector<1x256xf32>,
    %36 = vector.extract_strided_slice %7 {offsets = [3, 0], sizes = [1, 256], strides = [1, 1]} : vector<8x256xf32> to vector<1x256xf32>
    %cst_21 = arith.constant dense<0.000000e+00> : vector<1x256xf32>
    %37 = tpu.matmul %34, %1, %cst_21 {dimension_numbers = #tpu.dot_dimension_numbers<[1], [0], [0], [1], [0, 0, 1, 1], [], []>} : vector<1x256xf32>, vector<256x256xf32>, vector<1x256xf32> -> vector<1x256xf32>
    %38 = arith.addf %36, %37 : vector<1x256xf32>
    %cst_22 = arith.constant 5.000000e-01 : f32
    %39 = vector.broadcast %cst_22 : f32 to vector<1x256xf32>
    %40 = arith.cmpf ogt, %0, %39 : vector<1x256xf32>
    %cst_23 = arith.constant 0.000000e+00 : f32
    %41 = vector.broadcast %cst_23 : f32 to vector<1x256xf32>
    %42 = arith.maximumf %38, %41 : vector<1x256xf32>
    %43 = math.tanh %38 : vector<1x256xf32>
    %44 = arith.select %40, %42, %43 : vector<1x256xi1>, vector<1x256xf32>
    %c3 = arith.constant 3 : index
    %c0_24 = arith.constant 0 : index
    %45 = vector.load %arg14[%c3, %c0_24] : memref<8x256xf32, #tpu.memory_space<vmem>>, vector<1x256xf32>
    tpu.vector_store %arg14[%c3, %c0_24], %44 {strides = array<i32>} : memref<8x256xf32, #tpu.memory_space<vmem>>, vector<1x256xf32>,
    %46 = vector.extract_strided_slice %7 {offsets = [4, 0], sizes = [1, 256], strides = [1, 1]} : vector<8x256xf32> to vector<1x256xf32>
    %cst_25 = arith.constant dense<0.000000e+00> : vector<1x256xf32>
    %47 = tpu.matmul %44, %1, %cst_25 {dimension_numbers = #tpu.dot_dimension_numbers<[1], [0], [0], [1], [0, 0, 1, 1], [], []>} : vector<1x256xf32>, vector<256x256xf32>, vector<1x256xf32> -> vector<1x256xf32>
    %48 = arith.addf %46, %47 : vector<1x256xf32>
    %cst_26 = arith.constant 5.000000e-01 : f32
    %49 = vector.broadcast %cst_26 : f32 to vector<1x256xf32>
    %50 = arith.cmpf ogt, %0, %49 : vector<1x256xf32>
    %cst_27 = arith.constant 0.000000e+00 : f32
    %51 = vector.broadcast %cst_27 : f32 to vector<1x256xf32>
    %52 = arith.maximumf %48, %51 : vector<1x256xf32>
    %53 = math.tanh %48 : vector<1x256xf32>
    %54 = arith.select %50, %52, %53 : vector<1x256xi1>, vector<1x256xf32>
    %c4 = arith.constant 4 : index
    %c0_28 = arith.constant 0 : index
    %55 = vector.load %arg14[%c4, %c0_28] : memref<8x256xf32, #tpu.memory_space<vmem>>, vector<1x256xf32>
    tpu.vector_store %arg14[%c4, %c0_28], %54 {strides = array<i32>} : memref<8x256xf32, #tpu.memory_space<vmem>>, vector<1x256xf32>,
    %56 = vector.extract_strided_slice %7 {offsets = [5, 0], sizes = [1, 256], strides = [1, 1]} : vector<8x256xf32> to vector<1x256xf32>
    %cst_29 = arith.constant dense<0.000000e+00> : vector<1x256xf32>
    %57 = tpu.matmul %54, %1, %cst_29 {dimension_numbers = #tpu.dot_dimension_numbers<[1], [0], [0], [1], [0, 0, 1, 1], [], []>} : vector<1x256xf32>, vector<256x256xf32>, vector<1x256xf32> -> vector<1x256xf32>
    %58 = arith.addf %56, %57 : vector<1x256xf32>
    %cst_30 = arith.constant 5.000000e-01 : f32
    %59 = vector.broadcast %cst_30 : f32 to vector<1x256xf32>
    %60 = arith.cmpf ogt, %0, %59 : vector<1x256xf32>
    %cst_31 = arith.constant 0.000000e+00 : f32
    %61 = vector.broadcast %cst_31 : f32 to vector<1x256xf32>
    %62 = arith.maximumf %58, %61 : vector<1x256xf32>
    %63 = math.tanh %58 : vector<1x256xf32>
    %64 = arith.select %60, %62, %63 : vector<1x256xi1>, vector<1x256xf32>
    %c5 = arith.constant 5 : index
    %c0_32 = arith.constant 0 : index
    %65 = vector.load %arg14[%c5, %c0_32] : memref<8x256xf32, #tpu.memory_space<vmem>>, vector<1x256xf32>
    tpu.vector_store %arg14[%c5, %c0_32], %64 {strides = array<i32>} : memref<8x256xf32, #tpu.memory_space<vmem>>, vector<1x256xf32>,
    %66 = vector.extract_strided_slice %7 {offsets = [6, 0], sizes = [1, 256], strides = [1, 1]} : vector<8x256xf32> to vector<1x256xf32>
    %cst_33 = arith.constant dense<0.000000e+00> : vector<1x256xf32>
    %67 = tpu.matmul %64, %1, %cst_33 {dimension_numbers = #tpu.dot_dimension_numbers<[1], [0], [0], [1], [0, 0, 1, 1], [], []>} : vector<1x256xf32>, vector<256x256xf32>, vector<1x256xf32> -> vector<1x256xf32>
    %68 = arith.addf %66, %67 : vector<1x256xf32>
    %cst_34 = arith.constant 5.000000e-01 : f32
    %69 = vector.broadcast %cst_34 : f32 to vector<1x256xf32>
    %70 = arith.cmpf ogt, %0, %69 : vector<1x256xf32>
    %cst_35 = arith.constant 0.000000e+00 : f32
    %71 = vector.broadcast %cst_35 : f32 to vector<1x256xf32>
    %72 = arith.maximumf %68, %71 : vector<1x256xf32>
    %73 = math.tanh %68 : vector<1x256xf32>
    %74 = arith.select %70, %72, %73 : vector<1x256xi1>, vector<1x256xf32>
    %c6 = arith.constant 6 : index
    %c0_36 = arith.constant 0 : index
    %75 = vector.load %arg14[%c6, %c0_36] : memref<8x256xf32, #tpu.memory_space<vmem>>, vector<1x256xf32>
    tpu.vector_store %arg14[%c6, %c0_36], %74 {strides = array<i32>} : memref<8x256xf32, #tpu.memory_space<vmem>>, vector<1x256xf32>,
    %76 = vector.extract_strided_slice %7 {offsets = [7, 0], sizes = [1, 256], strides = [1, 1]} : vector<8x256xf32> to vector<1x256xf32>
    %cst_37 = arith.constant dense<0.000000e+00> : vector<1x256xf32>
    %77 = tpu.matmul %74, %1, %cst_37 {dimension_numbers = #tpu.dot_dimension_numbers<[1], [0], [0], [1], [0, 0, 1, 1], [], []>} : vector<1x256xf32>, vector<256x256xf32>, vector<1x256xf32> -> vector<1x256xf32>
    %78 = arith.addf %76, %77 : vector<1x256xf32>
    %cst_38 = arith.constant 5.000000e-01 : f32
    %79 = vector.broadcast %cst_38 : f32 to vector<1x256xf32>
    %80 = arith.cmpf ogt, %0, %79 : vector<1x256xf32>
    %cst_39 = arith.constant 0.000000e+00 : f32
    %81 = vector.broadcast %cst_39 : f32 to vector<1x256xf32>
    %82 = arith.maximumf %78, %81 : vector<1x256xf32>
    %83 = math.tanh %78 : vector<1x256xf32>
    %84 = arith.select %80, %82, %83 : vector<1x256xi1>, vector<1x256xf32>
    %c7 = arith.constant 7 : index
    %c0_40 = arith.constant 0 : index
    %85 = vector.load %arg14[%c7, %c0_40] : memref<8x256xf32, #tpu.memory_space<vmem>>, vector<1x256xf32>
    tpu.vector_store %arg14[%c7, %c0_40], %84 {strides = array<i32>} : memref<8x256xf32, #tpu.memory_space<vmem>>, vector<1x256xf32>,
    %c0_41 = arith.constant 0 : index
    %c0_42 = arith.constant 0 : index
    %86 = vector.load %arg14[%c0_41, %c0_42] : memref<8x256xf32, #tpu.memory_space<vmem>>, vector<8x256xf32>
    %c0_43 = arith.constant 0 : index
    %c0_44 = arith.constant 0 : index
    %87 = vector.load %arg5[%c0_43, %c0_44] : memref<256x64xf32, #tpu.memory_space<vmem>>, vector<256x64xf32>
    %cst_45 = arith.constant dense<0.000000e+00> : vector<8x64xf32>
    %88 = tpu.matmul %86, %87, %cst_45 {dimension_numbers = #tpu.dot_dimension_numbers<[1], [0], [0], [1], [0, 0, 1, 1], [], []>} : vector<8x256xf32>, vector<256x64xf32>, vector<8x64xf32> -> vector<8x64xf32>
    %c0_46 = arith.constant 0 : index
    %c0_47 = arith.constant 0 : index
    %89 = vector.load %arg6[%c0_46, %c0_47] : memref<64x512xf32, #tpu.memory_space<vmem>>, vector<64x512xf32>
    %cst_48 = arith.constant dense<0.000000e+00> : vector<8x512xf32>
    %90 = tpu.matmul %88, %89, %cst_48 {dimension_numbers = #tpu.dot_dimension_numbers<[1], [0], [0], [1], [0, 0, 1, 1], [], []>} : vector<8x64xf32>, vector<64x512xf32>, vector<8x512xf32> -> vector<8x512xf32>
    %c0_49 = arith.constant 0 : index
    %c0_50 = arith.constant 0 : index
    %91 = vector.load %arg7[%c0_49, %c0_50] : memref<1x512xf32, #tpu.memory_space<vmem>>, vector<1x512xf32>
    %92 = vector.broadcast %91 : vector<1x512xf32> to vector<8x512xf32>
    %93 = arith.addf %90, %92 : vector<8x512xf32>
    %cst_51 = arith.constant 0.000000e+00 : f32
    %94 = vector.broadcast %cst_51 : f32 to vector<8x512xf32>
    %95 = arith.cmpf oge, %93, %94 : vector<8x512xf32>
    %cst_52 = arith.constant 0.229166672 : f32
    %96 = vector.broadcast %cst_52 : f32 to vector<8x512xf32>
    %97 = arith.mulf %93, %96 : vector<8x512xf32>
    %98 = arith.select %95, %93, %97 : vector<8x512xi1>, vector<8x512xf32>
    %c0_53 = arith.constant 0 : index
    %c0_54 = arith.constant 0 : index
    %99 = vector.load %arg8[%c0_53, %c0_54] : memref<512x32xf32, #tpu.memory_space<vmem>>, vector<512x32xf32>
    %cst_55 = arith.constant dense<0.000000e+00> : vector<8x32xf32>
    %100 = tpu.matmul %98, %99, %cst_55 {dimension_numbers = #tpu.dot_dimension_numbers<[1], [0], [0], [1], [0, 0, 1, 1], [], []>} : vector<8x512xf32>, vector<512x32xf32>, vector<8x32xf32> -> vector<8x32xf32>
    %c0_56 = arith.constant 0 : index
    %c0_57 = arith.constant 0 : index
    %101 = vector.load %arg9[%c0_56, %c0_57] : memref<1x32xf32, #tpu.memory_space<vmem>>, vector<1x32xf32>
    %102 = vector.broadcast %101 : vector<1x32xf32> to vector<8x32xf32>
    %103 = arith.addf %100, %102 : vector<8x32xf32>
    %104 = math.tanh %103 : vector<8x32xf32>
    %c0_58 = arith.constant 0 : index
    %c0_59 = arith.constant 0 : index
    %105 = vector.load %arg10[%c0_58, %c0_59] : memref<512x16xf32, #tpu.memory_space<vmem>>, vector<512x16xf32>
    %cst_60 = arith.constant dense<0.000000e+00> : vector<8x16xf32>
    %106 = tpu.matmul %98, %105, %cst_60 {dimension_numbers = #tpu.dot_dimension_numbers<[1], [0], [0], [1], [0, 0, 1, 1], [], []>} : vector<8x512xf32>, vector<512x16xf32>, vector<8x16xf32> -> vector<8x16xf32>
    %c0_61 = arith.constant 0 : index
    %c0_62 = arith.constant 0 : index
    %107 = vector.load %arg11[%c0_61, %c0_62] : memref<32x16xf32, #tpu.memory_space<vmem>>, vector<32x16xf32>
    %cst_63 = arith.constant dense<0.000000e+00> : vector<8x16xf32>
    %108 = tpu.matmul %104, %107, %cst_63 {dimension_numbers = #tpu.dot_dimension_numbers<[1], [0], [0], [1], [0, 0, 1, 1], [], []>} : vector<8x32xf32>, vector<32x16xf32>, vector<8x16xf32> -> vector<8x16xf32>
    %109 = arith.addf %106, %108 : vector<8x16xf32>
    %c0_64 = arith.constant 0 : index
    %c0_65 = arith.constant 0 : index
    %110 = vector.load %arg12[%c0_64, %c0_65] : memref<1x16xf32, #tpu.memory_space<vmem>>, vector<1x16xf32>
    %111 = vector.broadcast %110 : vector<1x16xf32> to vector<8x16xf32>
    %112 = arith.addf %109, %111 : vector<8x16xf32>
    %c0_66 = arith.constant 0 : index
    %c0_67 = arith.constant 0 : index
    %113 = vector.load %arg13[%c0_66, %c0_67] : memref<8x16xf32, #tpu.memory_space<vmem>>, vector<8x16xf32>
    tpu.vector_store %arg13[%c0_66, %c0_67], %112 {strides = array<i32>} : memref<8x16xf32, #tpu.memory_space<vmem>>, vector<8x16xf32>,
    return
  }
}

</mosaic_0001>

<llo_original>
// kernel: _forward_impl.1
$region0: #{_forward_impl.1}
  #allocation0 [shape = 'u32[]', space=smem, size = 0x4, offset = 0x4, fixed_abs, tag = 'smem constant byte address 0x4 - core index']
  #allocation1 [shape = 'u32[144,128]{1,0:T(1,128)}', space=vmem, size = 0x12000, scoped, tag = 'internal scratch']
  #allocation2 [shape = 'f32[8,256]{1,0:T(8,128)}', space=vmem, size = 0x2000, scoped, tag = 'scratch operand']
  %s0 = inlined_call_operand.vmem [shape: f32[8,48], index: 0, kind: input, shape index: {}]
  %s1 = inlined_call_operand.vmem [shape: f32[48,256], index: 1, kind: input, shape index: {}]
  %s2 = inlined_call_operand.hbm [shape: f32[256,256], index: 2, kind: input, shape index: {}]
  %s3 = inlined_call_operand.vmem [shape: f32[1,256], index: 3, kind: input, shape index: {}]
  %s4 = inlined_call_operand.vmem [shape: f32[1,256], index: 4, kind: input, shape index: {}]
  %s5 = inlined_call_operand.hbm [shape: f32[256,64], index: 5, kind: input, shape index: {}]
  %s6 = inlined_call_operand.vmem [shape: f32[64,512], index: 6, kind: input, shape index: {}]
  %s7 = inlined_call_operand.vmem [shape: f32[1,512], index: 7, kind: input, shape index: {}]
  %s8 = inlined_call_operand.hbm [shape: f32[512,32], index: 8, kind: input, shape index: {}]
  %s9 = inlined_call_operand.vmem [shape: f32[1,32], index: 9, kind: input, shape index: {}]
  %s10 = inlined_call_operand.vmem [shape: f32[512,16], index: 10, kind: input, shape index: {}]
  %s11 = inlined_call_operand.vmem [shape: f32[32,16], index: 11, kind: input, shape index: {}]
  %s12 = inlined_call_operand.vmem [shape: f32[1,16], index: 12, kind: input, shape index: {}]
  %s13 = inlined_call_operand.hbm [shape: f32[8,16], index: 13, kind: output, shape index: {}]
  %s14 = sld [smem:[#allocation0]]
  $region74: #{_forward_impl.1} parent=0
    _
  %s16 = ssub.s32 1, %s14
  %s17 = scalar_select 0, %s16, %s14
  $region1: #{_forward_impl.1} parent=0
    #allocation3 [shape = 'u8[262144]{0}', space=vmem, size = 0x40000, scoped, tag = 'input window, operand 2, single buffered']
    #allocation4 [shape = 's32[1]{0}', space=sflag, size = 0x4, scoped, tag = 'scoped memory for _forward_impl.1']
    #allocation5 [shape = 's32[1]{0}', space=sflag, size = 0x4, scoped, tag = 'scoped memory for _forward_impl.1']
    #allocation6 [shape = 'u8[131072]{0}', space=vmem, size = 0x20000, scoped, tag = 'input window, operand 5, single buffered']
    #allocation7 [shape = 's32[1]{0}', space=sflag, size = 0x4, scoped, tag = 'scoped memory for _forward_impl.1']
    #allocation8 [shape = 'u8[262144]{0}', space=vmem, size = 0x40000, scoped, tag = 'input window, operand 8, single buffered']
    #allocation9 [shape = 'u8[4096]{0}', space=vmem, size = 0x1000, scoped, tag = 'output window, operand 0, single buffered']
    %18 = vsyncpa [#allocation4], 0
    %19 = vsyncpa [#allocation7], 0
    %20 = vsyncpa [#allocation5], 0
    // Predicated region
    $region2: #{_forward_impl.1} parent=1 // pred_check
      _
    $region3: #{_forward_impl.1} parent=1 // pred_check_branch
      %22 = sbr.rel (0) target = $region5
    $region4: #{_forward_impl.1} parent=1 // pred_region
      _
    $region5: #{_forward_impl.1} parent=1 // pred_fallthru
      _
    // Predicated region
    $region6: #{_forward_impl.1} parent=1 // pred_check
      _
    $region7: #{_forward_impl.1} parent=1 // pred_check_branch
      %24 = sbr.rel (0) target = $region9
    $region8: #{_forward_impl.1} parent=1 // pred_region
      _
    $region9: #{_forward_impl.1} parent=1 // pred_fallthru
      _
    // Predicated region
    $region10: #{_forward_impl.1} parent=1 // pred_check
      _
    $region11: #{_forward_impl.1} parent=1 // pred_check_branch
      %26 = sbr.rel (0) target = $region13
    $region12: #{_forward_impl.1} parent=1 // pred_region
      %s28 = ssub.s32 8192, 8192
      %29 = vsyncadd [#allocation4], %s28
      %s30 = sshll.u32 [#allocation3], 4
      %s31 = int_to_ptr.vmem [resolvable:$true] %s30
      %36 = dma.hbm_to_vmem [thread:$0]  %s2, 8192, %s31, [#allocation4], 256, 256, 16
    $region13: #{_forward_impl.1} parent=1 // pred_fallthru
      _
    // Predicated region
    $region14: #{_forward_impl.1} parent=1 // pred_check
      _
    $region15: #{_forward_impl.1} parent=1 // pred_check_branch
      %38 = sbr.rel (0) target = $region17
    $region16: #{_forward_impl.1} parent=1 // pred_region
      _
    $region17: #{_forward_impl.1} parent=1 // pred_fallthru
      _
    // Predicated region
    $region18: #{_forward_impl.1} parent=1 // pred_check
      _
    $region19: #{_forward_impl.1} parent=1 // pred_check_branch
      %40 = sbr.rel (0) target = $region21
    $region20: #{_forward_impl.1} parent=1 // pred_region
      _
    $region21: #{_forward_impl.1} parent=1 // pred_fallthru
      _
    // Predicated region
    $region22: #{_forward_impl.1} parent=1 // pred_check
      _
    $region23: #{_forward_impl.1} parent=1 // pred_check_branch
      %42 = sbr.rel (0) target = $region25
    $region24: #{_forward_impl.1} parent=1 // pred_region
      %s44 = ssub.s32 4096, 4096
      %45 = vsyncadd [#allocation7], %s44
      %s46 = sshll.u32 [#allocation6], 4
      %s47 = int_to_ptr.vmem [resolvable:$true] %s46
      %52 = dma.hbm_to_vmem [thread:$0]  %s5, 4096, %s47, [#allocation7], 128, 128, 8
    $region25: #{_forward_impl.1} parent=1 // pred_fallthru
      _
    // Predicated region
    $region26: #{_forward_impl.1} parent=1 // pred_check
      _
    $region27: #{_forward_impl.1} parent=1 // pred_check_branch
      %54 = sbr.rel (0) target = $region29
    $region28: #{_forward_impl.1} parent=1 // pred_region
      _
    $region29: #{_forward_impl.1} parent=1 // pred_fallthru
      _
    // Predicated region
    $region30: #{_forward_impl.1} parent=1 // pred_check
      _
    $region31: #{_forward_impl.1} parent=1 // pred_check_branch
      %56 = sbr.rel (0) target = $region33
    $region32: #{_forward_impl.1} parent=1 // pred_region
      _
    $region33: #{_forward_impl.1} parent=1 // pred_fallthru
      _
    // Predicated region
    $region34: #{_forward_impl.1} parent=1 // pred_check
      _
    $region35: #{_forward_impl.1} parent=1 // pred_check_branch
      %58 = sbr.rel (0) target = $region37
    $region36: #{_forward_impl.1} parent=1 // pred_region
      %s60 = ssub.s32 8192, 8192
      %61 = vsyncadd [#allocation7], %s60
      %s62 = sshll.u32 [#allocation8], 4
      %s63 = int_to_ptr.vmem [resolvable:$true] %s62
      %68 = dma.hbm_to_vmem [thread:$0]  %s8, 8192, %s63, [#allocation7], 128, 128, 8
    $region37: #{_forward_impl.1} parent=1 // pred_fallthru
      _
    // Predicated region
    $region38: #{_forward_impl.1} parent=1 // pred_check
      _
    $region39: #{_forward_impl.1} parent=1 // pred_check_branch
      %70 = sbr.rel (0) target = $region41
    $region40: #{_forward_impl.1} parent=1 // pred_region
      _
    $region41: #{_forward_impl.1} parent=1 // pred_fallthru
      _
    // Predicated region
    $region42: #{_forward_impl.1} parent=1 // pred_check
      _
    $region43: #{_forward_impl.1} parent=1 // pred_check_branch
      %72 = sbr.rel (0) target = $region45
    $region44: #{_forward_impl.1} parent=1 // pred_region
      _
    $region45: #{_forward_impl.1} parent=1 // pred_fallthru
      _
    // Predicated region
    $region46: #{_forward_impl.1} parent=1 // pred_check
      _
    $region47: #{_forward_impl.1} parent=1 // pred_check_branch
      %74 = sbr.rel (0) target = $region49
    $region48: #{_forward_impl.1} parent=1 // pred_region
      _
    $region49: #{_forward_impl.1} parent=1 // pred_fallthru
      _
    // Predicated region
    $region50: #{_forward_impl.1} parent=1 // pred_check
      _
    $region51: #{_forward_impl.1} parent=1 // pred_check_branch
      %76 = sbr.rel (0) target = $region53
    $region52: #{_forward_impl.1} parent=1 // pred_region
      _
    $region53: #{_forward_impl.1} parent=1 // pred_fallthru
      _
    // Predicated region
    $region54: #{_forward_impl.1} parent=1 // pred_check
      _
    $region55: #{_forward_impl.1} parent=1 // pred_check_branch
      %78 = sbr.rel (0) target = $region57
    $region56: #{_forward_impl.1} parent=1 // pred_region
      %79 = dma.done [#allocation4], 8192
    $region57: #{_forward_impl.1} parent=1 // pred_fallthru
      _
    // Predicated region
    $region58: #{_forward_impl.1} parent=1 // pred_check
      _
    $region59: #{_forward_impl.1} parent=1 // pred_check_branch
      %81 = sbr.rel (0) target = $region61
    $region60: #{_forward_impl.1} parent=1 // pred_region
      %82 = dma.done [#allocation7], 4096
    $region61: #{_forward_impl.1} parent=1 // pred_fallthru
      _
    // Predicated region
    $region62: #{_forward_impl.1} parent=1 // pred_check
      _
    $region63: #{_forward_impl.1} parent=1 // pred_check_branch
      %84 = sbr.rel (0) target = $region65
    $region64: #{_forward_impl.1} parent=1 // pred_region
      %85 = dma.done [#allocation7], 8192
    $region65: #{_forward_impl.1} parent=1 // pred_fallthru
      _
    %v86 = vld [vmem:[%s4] sm:$0x3]
    %v87 = vld [vmem:[#allocation3] sm:$0xff]
    %v88 = vld [vmem:[#allocation3 + $0x8] sm:$0xff]
    %v89 = vld [vmem:[#allocation3 + $0x10] sm:$0xff]
    %v90 = vld [vmem:[#allocation3 + $0x18] sm:$0xff]
    %v91 = vld [vmem:[#allocation3 + $0x20] sm:$0xff]
    %v92 = vld [vmem:[#allocation3 + $0x28] sm:$0xff]
    %v93 = vld [vmem:[#allocation3 + $0x30] sm:$0xff]
    %v94 = vld [vmem:[#allocation3 + $0x38] sm:$0xff]
    %v95 = vld [vmem:[#allocation3 + $0x40] sm:$0xff]
    %v96 = vld [vmem:[#allocation3 + $0x48] sm:$0xff]
    %v97 = vld [vmem:[#allocation3 + $0x50] sm:$0xff]
    %v98 = vld [vmem:[#allocation3 + $0x58] sm:$0xff]
    %v99 = vld [vmem:[#allocation3 + $0x60] sm:$0xff]
    %v100 = vld [vmem:[#allocation3 + $0x68] sm:$0xff]
    %v101 = vld [vmem:[#allocation3 + $0x70] sm:$0xff]
    %v102 = vld [vmem:[#allocation3 + $0x78] sm:$0xff]
    %v103 = vld [vmem:[#allocation3 + $0x80] sm:$0xff]
    %v104 = vld [vmem:[#allocation3 + $0x88] sm:$0xff]
    %v105 = vld [vmem:[#allocation3 + $0x90] sm:$0xff]
    %v106 = vld [vmem:[#allocation3 + $0x98] sm:$0xff]
    %v107 = vld [vmem:[#allocation3 + $0xa0] sm:$0xff]
    %v108 = vld [vmem:[#allocation3 + $0xa8] sm:$0xff]
    %v109 = vld [vmem:[#allocation3 + $0xb0] sm:$0xff]
    %v110 = vld [vmem:[#allocation3 + $0xb8] sm:$0xff]
    %v111 = vld [vmem:[#allocation3 + $0xc0] sm:$0xff]
    %v112 = vld [vmem:[#allocation3 + $0xc8] sm:$0xff]
    %v113 = vld [vmem:[#allocation3 + $0xd0] sm:$0xff]
    %v114 = vld [vmem:[#allocation3 + $0xd8] sm:$0xff]
    %v115 = vld [vmem:[#allocation3 + $0xe0] sm:$0xff]
    %v116 = vld [vmem:[#allocation3 + $0xe8] sm:$0xff]
    %v117 = vld [vmem:[#allocation3 + $0xf0] sm:$0xff]
    %v118 = vld [vmem:[#allocation3 + $0xf8] sm:$0xff]
    %v119 = vld [vmem:[#allocation3 + $0x100] sm:$0xff]
    %v120 = vld [vmem:[#allocation3 + $0x108] sm:$0xff]
    %v121 = vld [vmem:[#allocation3 + $0x110] sm:$0xff]
    %v122 = vld [vmem:[#allocation3 + $0x118] sm:$0xff]
    %v123 = vld [vmem:[#allocation3 + $0x120] sm:$0xff]
    %v124 = vld [vmem:[#allocation3 + $0x128] sm:$0xff]
    %v125 = vld [vmem:[#allocation3 + $0x130] sm:$0xff]
    %v126 = vld [vmem:[#allocation3 + $0x138] sm:$0xff]
    %v127 = vld [vmem:[#allocation3 + $0x140] sm:$0xff]
    %v128 = vld [vmem:[#allocation3 + $0x148] sm:$0xff]
    %v129 = vld [vmem:[#allocation3 + $0x150] sm:$0xff]
    %v130 = vld [vmem:[#allocation3 + $0x158] sm:$0xff]
    %v131 = vld [vmem:[#allocation3 + $0x160] sm:$0xff]
    %v132 = vld [vmem:[#allocation3 + $0x168] sm:$0xff]
    %v133 = vld [vmem:[#allocation3 + $0x170] sm:$0xff]
    %v134 = vld [vmem:[#allocation3 + $0x178] sm:$0xff]
    %v135 = vld [vmem:[#allocation3 + $0x180] sm:$0xff]
    %v136 = vld [vmem:[#allocation3 + $0x188] sm:$0xff]
    %v137 = vld [vmem:[#allocation3 + $0x190] sm:$0xff]
    %v138 = vld [vmem:[#allocation3 + $0x198] sm:$0xff]
    %v139 = vld [vmem:[#allocation3 + $0x1a0] sm:$0xff]
    %v140 = vld [vmem:[#allocation3 + $0x1a8] sm:$0xff]
    %v141 = vld [vmem:[#allocation3 + $0x1b0] sm:$0xff]
    %v142 = vld [vmem:[#allocation3 + $0x1b8] sm:$0xff]
    %v143 = vld [vmem:[#allocation3 + $0x1c0] sm:$0xff]
    %v144 = vld [vmem:[#allocation3 + $0x1c8] sm:$0xff]
    %v145 = vld [vmem:[#allocation3 + $0x1d0] sm:$0xff]
    %v146 = vld [vmem:[#allocation3 + $0x1d8] sm:$0xff]
    %v147 = vld [vmem:[#allocation3 + $0x1e0] sm:$0xff]
    %v148 = vld [vmem:[#allocation3 + $0x1e8] sm:$0xff]
    %v149 = vld [vmem:[#allocation3 + $0x1f0] sm:$0xff]
    %v150 = vld [vmem:[#allocation3 + $0x1f8] sm:$0xff]
    %v151 = vld [vmem:[%s0] sm:$0xff]
    %v152 = vld [vmem:[%s1] sm:$0xff]
    %v153 = vld [vmem:[%s1 + $0x8] sm:$0xff]
    %v154 = vld [vmem:[%s1 + $0x10] sm:$0xff]
    %v155 = vld [vmem:[%s1 + $0x18] sm:$0xff]
    %v156 = vld [vmem:[%s1 + $0x20] sm:$0xff]
    %v157 = vld [vmem:[%s1 + $0x28] sm:$0xff]
    %v158 = vld [vmem:[%s1 + $0x30] sm:$0xff]
    %v159 = vld [vmem:[%s1 + $0x38] sm:$0xff]
    %v160 = vld [vmem:[%s1 + $0x40] sm:$0xff]
    %v161 = vld [vmem:[%s1 + $0x48] sm:$0xff]
    %v162 = vld [vmem:[%s1 + $0x50] sm:$0xff]
    %v163 = vld [vmem:[%s1 + $0x58] sm:$0xff]
    %v164 = vld [vmem:[%s3] sm:$0x3]
    %v166 = vlaneseq
    %v167 = vshrl.u32 %v166, 7
    %v168 = vsub.s32 0, %v167
    %v169 = vrot.slane %v164, %v168
    %v170 = vlaneseq
    %v171 = vshrl.u32 %v170, 7
    %v172 = vsub.s32 1, %v171
    %v173 = vrot.slane %v164, %v172
    %vm176 = vcmask 392192
    %v178 = vsel %vm176, %v151, 0
    %180 = vmatprep.subr.mxu0 %v153
    %181 = vmatpush1.msra.mxu0 %v152
    %182 = vmatprep.subr.mxu0 %v155
    %183 = vmatpush1.msra.mxu0 %v154
    %184 = vmatprep.subr.mxu0 %v157
    %185 = vmatpush1.msra.mxu0 %v156
    %186 = vmatprep.subr.mxu0 %v159
    %187 = vmatpush1.msra.mxu0 %v158
    %188 = vmatprep.subr.mxu0 %v161
    %189 = vmatpush1.msra.mxu0 %v160
    %190 = vmatprep.subr.mxu0 %v163
    %191 = vmatpush1.msra.mxu0 %v162
    %192 = vmatprep.subr.mxu0 0.0
    %193 = vmatpush1.msra.mxu0 0.0
    %194 = vmatprep.subr.mxu0 0.0
    %195 = vmatpush1.msra.mxu0 0.0
    %196 = vmatprep.subr.mxu0 0.0
    %197 = vmatpush1.msra.mxu0 0.0
    %198 = vmatprep.subr.mxu0 0.0
    %199 = vmatpush1.msra.mxu0 0.0
    %200 = vmatprep.subr.mxu0 0.0
    %201 = vmatpush1.msra.mxu0 0.0
    %202 = vmatprep.subr.mxu0 0.0
    %203 = vmatpush1.msra.mxu0 0.0
    %204 = vmatprep.subr.mxu0 0.0
    %205 = vmatpush1.msra.mxu0 0.0
    %206 = vmatprep.subr.mxu0 0.0
    %207 = vmatpush1.msra.mxu0 0.0
    %208 = vmatprep.subr.mxu0 0.0
    %209 = vmatpush1.msra.mxu0 0.0
    %210 = vmatprep.subr.mxu0 0.0
    %211 = vmatpush1.msra.mxu0 0.0
    %212 = vmatprep.subr.mxu0 0.0
    %213 = vmatpush1.msra.mxu0 0.0
    %214 = vmatprep.subr.mxu0 0.0
    %215 = vmatpush1.msra.mxu0 0.0
    %216 = vmatprep.subr.mxu0 0.0
    %217 = vmatpush1.msra.mxu0 0.0
    %218 = vmatprep.subr.mxu0 0.0
    %219 = vmatpush1.msra.mxu0 0.0
    %220 = vmatprep.subr.mxu0 0.0
    %221 = vmatpush1.msra.mxu0 0.0
    %222 = vmatprep.subr.mxu0 0.0
    %223 = vmatpush1.msra.mxu0 0.0
    %224 = vmatprep.subr.mxu0 0.0
    %225 = vmatpush1.msra.mxu0 0.0
    %226 = vmatprep.subr.mxu0 0.0
    %227 = vmatpush1.msra.mxu0 0.0
    %228 = vmatprep.subr.mxu0 0.0
    %229 = vmatpush1.msra.mxu0 0.0
    %230 = vmatprep.subr.mxu0 0.0
    %231 = vmatpush1.msra.mxu0 0.0
    %232 = vmatprep.subr.mxu0 0.0
    %233 = vmatpush1.msra.mxu0 0.0
    %234 = vmatprep.subr.mxu0 0.0
    %235 = vmatpush1.msra.mxu0 0.0
    %236 = vmatprep.subr.mxu0 0.0
    %237 = vmatpush1.msra.mxu0 0.0
    %238 = vmatprep.subr.mxu0 0.0
    %239 = vmatpush1.msra.mxu0 0.0
    %240 = vmatprep.subr.mxu0 0.0
    %241 = vmatpush1.msra.mxu0 0.0
    %242 = vmatprep.subr.mxu0 0.0
    %243 = vmatpush1.msra.mxu0 0.0
    %244 = vmatprep.mubr.f32.mxu0 0.0
    %245 = vmatmul.mubr.f32.gmra.mrb[0].mxu0 %v178
    %v246 = vpop.f32.mrb[0].mxu0
    %v247 = vadd.f32 %v169, %v246
    %v248 = vpop.f32.mrb[0].mxu0
    %v249 = vadd.f32 %v173, %v248
    %250 = vdwg.mxu0
    %vm251 = vcmp.gt.f32.partialorder %v86, 0.5
    %v252 = vmax.f32 %v247, 0.0
    %v253 = vmax.f32 %v249, 0.0
    %v254 = vtanh.pop %v247
    %v255 = vtanh.pop %v249
    %v258 = vcombine.low %v252, %v253
    %v260 = vunpack.c.l.s4 1966171168
    %v261 = vunpack.c.0.s8 %v260
    %v262 = vlaneseq
    %v263 = vshrl.u32 %v262, 7
    %v264 = vsub.s32 %v261, %v263
    %v265 = vrot.slane %v258, %v264
    %v267 = vunpack.c.l.s4 1966171168
    %v268 = vunpack.c.0.s8 %v267
    %v269 = vlaneseq
    %v270 = vshrl.u32 %v269, 7
    %v271 = vsub.s32 %v268, %v270
    %v272 = vrot.slane %v265, %v271
    %v276 = vcombine.low %v254, %v255
    %v278 = vunpack.c.l.s4 1966171168
    %v279 = vunpack.c.0.s8 %v278
    %v280 = vlaneseq
    %v281 = vshrl.u32 %v280, 7
    %v282 = vsub.s32 %v279, %v281
    %v283 = vrot.slane %v276, %v282
    %v285 = vunpack.c.l.s4 1966171168
    %v286 = vunpack.c.0.s8 %v285
    %v287 = vlaneseq
    %v288 = vshrl.u32 %v287, 7
    %v289 = vsub.s32 %v286, %v288
    %v290 = vrot.slane %v283, %v289
    %v292 = vsel %vm251, %v272, %v290
    %v293 = vlaneseq
    %vm294 = vcmp.ge.s32.totalorder %v293, 0
    %vm295 = vcmp.lt.s32.totalorder %v293, 256
    %vm296 = vmand %vm294, %vm295
    %297 = vst.msk [vmem:[#allocation2] ss:$8 sm:$0x3] %vm296, %v292
    %298 = vst.msk [vmem:[#allocation2] ss:$8 sm:$0x0] %vm296, %v292
    %v300 = vlaneseq
    %v301 = vshrl.u32 %v300, 7
    %v302 = vsub.s32 0, %v301
    %v303 = vrot.slane %v292, %v302
    %v304 = vlaneseq
    %v305 = vshrl.u32 %v304, 7
    %v306 = vsub.s32 1, %v305
    %v307 = vrot.slane %v292, %v306
    %310 = vmatprep.subr.mxu0 %v88
    %311 = vmatpush1.msra.mxu0 %v87
    %312 = vmatprep.subr.mxu0 %v90
    %313 = vmatpush1.msra.mxu0 %v89
    %314 = vmatprep.subr.mxu0 %v92
    %315 = vmatpush1.msra.mxu0 %v91
    %316 = vmatprep.subr.mxu0 %v94
    %317 = vmatpush1.msra.mxu0 %v93
    %318 = vmatprep.subr.mxu0 %v96
    %319 = vmatpush1.msra.mxu0 %v95
    %320 = vmatprep.subr.mxu0 %v98
    %321 = vmatpush1.msra.mxu0 %v97
    %322 = vmatprep.subr.mxu0 %v100
    %323 = vmatpush1.msra.mxu0 %v99
    %324 = vmatprep.subr.mxu0 %v102
    %325 = vmatpush1.msra.mxu0 %v101
    %326 = vmatprep.subr.mxu0 %v104
    %327 = vmatpush1.msra.mxu0 %v103
    %328 = vmatprep.subr.mxu0 %v106
    %329 = vmatpush1.msra.mxu0 %v105
    %330 = vmatprep.subr.mxu0 %v108
    %331 = vmatpush1.msra.mxu0 %v107
    %332 = vmatprep.subr.mxu0 %v110
    %333 = vmatpush1.msra.mxu0 %v109
    %334 = vmatprep.subr.mxu0 %v112
    %335 = vmatpush1.msra.mxu0 %v111
    %336 = vmatprep.subr.mxu0 %v114
    %337 = vmatpush1.msra.mxu0 %v113
    %338 = vmatprep.subr.mxu0 %v116
    %339 = vmatpush1.msra.mxu0 %v115
    %340 = vmatprep.subr.mxu0 %v118
    %341 = vmatpush1.msra.mxu0 %v117
    %342 = vmatprep.subr.mxu0 %v120
    %343 = vmatpush1.msra.mxu0 %v119
    %344 = vmatprep.subr.mxu0 %v122
    %345 = vmatpush1.msra.mxu0 %v121
    %346 = vmatprep.subr.mxu0 %v124
    %347 = vmatpush1.msra.mxu0 %v123
    %348 = vmatprep.subr.mxu0 %v126
    %349 = vmatpush1.msra.mxu0 %v125
    %350 = vmatprep.subr.mxu0 %v128
    %351 = vmatpush1.msra.mxu0 %v127
    %352 = vmatprep.subr.mxu0 %v130
    %353 = vmatpush1.msra.mxu0 %v129
    %354 = vmatprep.subr.mxu0 %v132
    %355 = vmatpush1.msra.mxu0 %v131
    %356 = vmatprep.subr.mxu0 %v134
    %357 = vmatpush1.msra.mxu0 %v133
    %358 = vmatprep.subr.mxu0 %v136
    %359 = vmatpush1.msra.mxu0 %v135
    %360 = vmatprep.subr.mxu0 %v138
    %361 = vmatpush1.msra.mxu0 %v137
    %362 = vmatprep.subr.mxu0 %v140
    %363 = vmatpush1.msra.mxu0 %v139
    %364 = vmatprep.subr.mxu0 %v142
    %365 = vmatpush1.msra.mxu0 %v141
    %366 = vmatprep.subr.mxu0 %v144
    %367 = vmatpush1.msra.mxu0 %v143
    %368 = vmatprep.subr.mxu0 %v146
    %369 = vmatpush1.msra.mxu0 %v145
    %370 = vmatprep.subr.mxu0 %v148
    %371 = vmatpush1.msra.mxu0 %v147
    %372 = vmatprep.subr.mxu0 %v150
    %373 = vmatpush1.msra.mxu0 %v149
    %374 = vmatprep.mubr.f32.mxu0 %v307
    %375 = vmatmul.mubr.f32.gmra.mrb[0].mxu0 %v303
    %v376 = vpop.f32.mrb[0].mxu0
    %v377 = vadd.f32 0.0, %v376
    %v378 = vpop.f32.mrb[0].mxu0
    %v379 = vadd.f32 0.0, %v378
    %380 = vdwg.mxu0
    %v383 = vrot.slane %v377, 7
    %v384 = vrot.slane %v379, 7
    %v387 = vadd.f32 %v247, %v383
    %v388 = vadd.f32 %v249, %v384
    %v389 = vmax.f32 %v387, 0.0
    %v390 = vmax.f32 %v388, 0.0
    %v391 = vtanh.pop %v387
    %v392 = vtanh.pop %v388
    %v395 = vcombine.low %v389, %v390
    %v397 = vunpack.c.l.s4 1966171168
    %v398 = vunpack.c.0.s8 %v397
    %v399 = vlaneseq
    %v400 = vshrl.u32 %v399, 7
    %v401 = vsub.s32 %v398, %v400
    %v402 = vrot.slane %v395, %v401
    %v403 = vcombine.high %v402, %v402
    %v405 = vunpack.c.l.s4 1966171168
    %v406 = vunpack.c.0.s8 %v405
    %v407 = vlaneseq
    %v408 = vshrl.u32 %v407, 7
    %v409 = vsub.s32 %v406, %v408
    %v410 = vrot.slane %v403, %v409
    %v414 = vcombine.low %v391, %v392
    %v416 = vunpack.c.l.s4 1966171168
    %v417 = vunpack.c.0.s8 %v416
    %v418 = vlaneseq
    %v419 = vshrl.u32 %v418, 7
    %v420 = vsub.s32 %v417, %v419
    %v421 = vrot.slane %v414, %v420
    %v422 = vcombine.high %v421, %v421
    %v424 = vunpack.c.l.s4 1966171168
    %v425 = vunpack.c.0.s8 %v424
    %v426 = vlaneseq
    %v427 = vshrl.u32 %v426, 7
    %v428 = vsub.s32 %v425, %v427
    %v429 = vrot.slane %v422, %v428
    %v431 = vsel %vm251, %v410, %v429
    %s432 = scalar_lea.vmem [#allocation2], 1
    %433 = vst.msk [vmem:[%s432] ss:$8 sm:$0x3] %vm296, %v431
    %434 = vst.msk [vmem:[%s432] ss:$8 sm:$0x0] %vm296, %v431
    %v436 = vlaneseq
    %v437 = vshrl.u32 %v436, 7
    %v438 = vsub.s32 0, %v437
    %v439 = vrot.slane %v431, %v438
    %v440 = vlaneseq
    %v441 = vshrl.u32 %v440, 7
    %v442 = vsub.s32 1, %v441
    %v443 = vrot.slane %v431, %v442
    %446 = vmatprep.subr.mxu0 %v88
    %447 = vmatpush1.msra.mxu0 %v87
    %448 = vmatprep.subr.mxu0 %v90
    %449 = vmatpush1.msra.mxu0 %v89
    %450 = vmatprep.subr.mxu0 %v92
    %451 = vmatpush1.msra.mxu0 %v91
    %452 = vmatprep.subr.mxu0 %v94
    %453 = vmatpush1.msra.mxu0 %v93
    %454 = vmatprep.subr.mxu0 %v96
    %455 = vmatpush1.msra.mxu0 %v95
    %456 = vmatprep.subr.mxu0 %v98
    %457 = vmatpush1.msra.mxu0 %v97
    %458 = vmatprep.subr.mxu0 %v100
    %459 = vmatpush1.msra.mxu0 %v99
    %460 = vmatprep.subr.mxu0 %v102
    %461 = vmatpush1.msra.mxu0 %v101
    %462 = vmatprep.subr.mxu0 %v104
    %463 = vmatpush1.msra.mxu0 %v103
    %464 = vmatprep.subr.mxu0 %v106
    %465 = vmatpush1.msra.mxu0 %v105
    %466 = vmatprep.subr.mxu0 %v108
    %467 = vmatpush1.msra.mxu0 %v107
    %468 = vmatprep.subr.mxu0 %v110
    %469 = vmatpush1.msra.mxu0 %v109
    %470 = vmatprep.subr.mxu0 %v112
    %471 = vmatpush1.msra.mxu0 %v111
    %472 = vmatprep.subr.mxu0 %v114
    %473 = vmatpush1.msra.mxu0 %v113
    %474 = vmatprep.subr.mxu0 %v116
    %475 = vmatpush1.msra.mxu0 %v115
    %476 = vmatprep.subr.mxu0 %v118
    %477 = vmatpush1.msra.mxu0 %v117
    %478 = vmatprep.subr.mxu0 %v120
    %479 = vmatpush1.msra.mxu0 %v119
    %480 = vmatprep.subr.mxu0 %v122
    %481 = vmatpush1.msra.mxu0 %v121
    %482 = vmatprep.subr.mxu0 %v124
    %483 = vmatpush1.msra.mxu0 %v123
    %484 = vmatprep.subr.mxu0 %v126
    %485 = vmatpush1.msra.mxu0 %v125
    %486 = vmatprep.subr.mxu0 %v128
    %487 = vmatpush1.msra.mxu0 %v127
    %488 = vmatprep.subr.mxu0 %v130
    %489 = vmatpush1.msra.mxu0 %v129
    %490 = vmatprep.subr.mxu0 %v132
    %491 = vmatpush1.msra.mxu0 %v131
    %492 = vmatprep.subr.mxu0 %v134
    %493 = vmatpush1.msra.mxu0 %v133
    %494 = vmatprep.subr.mxu0 %v136
    %495 = vmatpush1.msra.mxu0 %v135
    %496 = vmatprep.subr.mxu0 %v138
    %497 = vmatpush1.msra.mxu0 %v137
    %498 = vmatprep.subr.mxu0 %v140
    %499 = vmatpush1.msra.mxu0 %v139
    %500 = vmatprep.subr.mxu0 %v142
    %501 = vmatpush1.msra.mxu0 %v141
    %502 = vmatprep.subr.mxu0 %v144
    %503 = vmatpush1.msra.mxu0 %v143
    %504 = vmatprep.subr.mxu0 %v146
    %505 = vmatpush1.msra.mxu0 %v145
    %506 = vmatprep.subr.mxu0 %v148
    %507 = vmatpush1.msra.mxu0 %v147
    %508 = vmatprep.subr.mxu0 %v150
    %509 = vmatpush1.msra.mxu0 %v149
    %510 = vmatprep.mubr.f32.mxu0 %v443
    %511 = vmatmul.mubr.f32.gmra.mrb[0].mxu0 %v439
    %v512 = vpop.f32.mrb[0].mxu0
    %v513 = vadd.f32 0.0, %v512
    %v514 = vpop.f32.mrb[0].mxu0
    %v515 = vadd.f32 0.0, %v514
    %516 = vdwg.mxu0
    %v519 = vrot.slane %v513, 6
    %v520 = vrot.slane %v515, 6
    %v523 = vadd.f32 %v247, %v519
    %v524 = vadd.f32 %v249, %v520
    %v525 = vmax.f32 %v523, 0.0
    %v526 = vmax.f32 %v524, 0.0
    %v527 = vtanh.pop %v523
    %v528 = vtanh.pop %v524
    %v531 = vcombine.low %v525, %v526
    %v533 = vunpack.c.l.s4 1966171168
    %v534 = vunpack.c.0.s8 %v533
    %v535 = vlaneseq
    %v536 = vshrl.u32 %v535, 7
    %v537 = vsub.s32 %v534, %v536
    %v538 = vrot.slane %v531, %v537
    %v540 = vunpack.c.l.s4 1966171168
    %v541 = vunpack.c.0.s8 %v540
    %v542 = vlaneseq
    %v543 = vshrl.u32 %v542, 7
    %v544 = vsub.s32 %v541, %v543
    %v545 = vrot.slane %v538, %v544
    %v546 = vcombine.high %v545, %v545
    %v550 = vcombine.low %v527, %v528
    %v552 = vunpack.c.l.s4 1966171168
    %v553 = vunpack.c.0.s8 %v552
    %v554 = vlaneseq
    %v555 = vshrl.u32 %v554, 7
    %v556 = vsub.s32 %v553, %v555
    %v557 = vrot.slane %v550, %v556
    %v559 = vunpack.c.l.s4 1966171168
    %v560 = vunpack.c.0.s8 %v559
    %v561 = vlaneseq
    %v562 = vshrl.u32 %v561, 7
    %v563 = vsub.s32 %v560, %v562
    %v564 = vrot.slane %v557, %v563
    %v565 = vcombine.high %v564, %v564
    %v567 = vsel %vm251, %v546, %v565
    %s568 = scalar_lea.vmem [#allocation2], 2
    %569 = vst.msk [vmem:[%s568] ss:$8 sm:$0x3] %vm296, %v567
    %570 = vst.msk [vmem:[%s568] ss:$8 sm:$0x0] %vm296, %v567
    %v572 = vlaneseq
    %v573 = vshrl.u32 %v572, 7
    %v574 = vsub.s32 0, %v573
    %v575 = vrot.slane %v567, %v574
    %v576 = vlaneseq
    %v577 = vshrl.u32 %v576, 7
    %v578 = vsub.s32 1, %v577
    %v579 = vrot.slane %v567, %v578
    %582 = vmatprep.subr.mxu0 %v88
    %583 = vmatpush1.msra.mxu0 %v87
    %584 = vmatprep.subr.mxu0 %v90
    %585 = vmatpush1.msra.mxu0 %v89
    %586 = vmatprep.subr.mxu0 %v92
    %587 = vmatpush1.msra.mxu0 %v91
    %588 = vmatprep.subr.mxu0 %v94
    %589 = vmatpush1.msra.mxu0 %v93
    %590 = vmatprep.subr.mxu0 %v96
    %591 = vmatpush1.msra.mxu0 %v95
    %592 = vmatprep.subr.mxu0 %v98
    %593 = vmatpush1.msra.mxu0 %v97
    %594 = vmatprep.subr.mxu0 %v100
    %595 = vmatpush1.msra.mxu0 %v99
    %596 = vmatprep.subr.mxu0 %v102
    %597 = vmatpush1.msra.mxu0 %v101
    %598 = vmatprep.subr.mxu0 %v104
    %599 = vmatpush1.msra.mxu0 %v103
    %600 = vmatprep.subr.mxu0 %v106
    %601 = vmatpush1.msra.mxu0 %v105
    %602 = vmatprep.subr.mxu0 %v108
    %603 = vmatpush1.msra.mxu0 %v107
    %604 = vmatprep.subr.mxu0 %v110
    %605 = vmatpush1.msra.mxu0 %v109
    %606 = vmatprep.subr.mxu0 %v112
    %607 = vmatpush1.msra.mxu0 %v111
    %608 = vmatprep.subr.mxu0 %v114
    %609 = vmatpush1.msra.mxu0 %v113
    %610 = vmatprep.subr.mxu0 %v116
    %611 = vmatpush1.msra.mxu0 %v115
    %612 = vmatprep.subr.mxu0 %v118
    %613 = vmatpush1.msra.mxu0 %v117
    %614 = vmatprep.subr.mxu0 %v120
    %615 = vmatpush1.msra.mxu0 %v119
    %616 = vmatprep.subr.mxu0 %v122
    %617 = vmatpush1.msra.mxu0 %v121
    %618 = vmatprep.subr.mxu0 %v124
    %619 = vmatpush1.msra.mxu0 %v123
    %620 = vmatprep.subr.mxu0 %v126
    %621 = vmatpush1.msra.mxu0 %v125
    %622 = vmatprep.subr.mxu0 %v128
    %623 = vmatpush1.msra.mxu0 %v127
    %624 = vmatprep.subr.mxu0 %v130
    %625 = vmatpush1.msra.mxu0 %v129
    %626 = vmatprep.subr.mxu0 %v132
    %627 = vmatpush1.msra.mxu0 %v131
    %628 = vmatprep.subr.mxu0 %v134
    %629 = vmatpush1.msra.mxu0 %v133
    %630 = vmatprep.subr.mxu0 %v136
    %631 = vmatpush1.msra.mxu0 %v135
    %632 = vmatprep.subr.mxu0 %v138
    %633 = vmatpush1.msra.mxu0 %v137
    %634 = vmatprep.subr.mxu0 %v140
    %635 = vmatpush1.msra.mxu0 %v139
    %636 = vmatprep.subr.mxu0 %v142
    %637 = vmatpush1.msra.mxu0 %v141
    %638 = vmatprep.subr.mxu0 %v144
    %639 = vmatpush1.msra.mxu0 %v143
    %640 = vmatprep.subr.mxu0 %v146
    %641 = vmatpush1.msra.mxu0 %v145
    %642 = vmatprep.subr.mxu0 %v148
    %643 = vmatpush1.msra.mxu0 %v147
    %644 = vmatprep.subr.mxu0 %v150
    %645 = vmatpush1.msra.mxu0 %v149
    %646 = vmatprep.mubr.f32.mxu0 %v579
    %647 = vmatmul.mubr.f32.gmra.mrb[0].mxu0 %v575
    %v648 = vpop.f32.mrb[0].mxu0
    %v649 = vadd.f32 0.0, %v648
    %v650 = vpop.f32.mrb[0].mxu0
    %v651 = vadd.f32 0.0, %v650
    %652 = vdwg.mxu0
    %v655 = vrot.slane %v649, 5
    %v656 = vrot.slane %v651, 5
    %v659 = vadd.f32 %v247, %v655
    %v660 = vadd.f32 %v249, %v656
    %v661 = vmax.f32 %v659, 0.0
    %v662 = vmax.f32 %v660, 0.0
    %v663 = vtanh.pop %v659
    %v664 = vtanh.pop %v660
    %v667 = vcombine.low %v661, %v662
    %v669 = vunpack.c.l.s4 1966171168
    %v670 = vunpack.c.0.s8 %v669
    %v671 = vlaneseq
    %v672 = vshrl.u32 %v671, 7
    %v673 = vsub.s32 %v670, %v672
    %v674 = vrot.slane %v667, %v673
    %v675 = vcombine.high %v674, %v674
    %v677 = vunpack.c.l.s4 1966171168
    %v678 = vunpack.c.0.s8 %v677
    %v679 = vlaneseq
    %v680 = vshrl.u32 %v679, 7
    %v681 = vsub.s32 %v678, %v680
    %v682 = vrot.slane %v675, %v681
    %v683 = vcombine.high %v682, %v682
    %v687 = vcombine.low %v663, %v664
    %v689 = vunpack.c.l.s4 1966171168
    %v690 = vunpack.c.0.s8 %v689
    %v691 = vlaneseq
    %v692 = vshrl.u32 %v691, 7
    %v693 = vsub.s32 %v690, %v692
    %v694 = vrot.slane %v687, %v693
    %v695 = vcombine.high %v694, %v694
    %v697 = vunpack.c.l.s4 1966171168
    %v698 = vunpack.c.0.s8 %v697
    %v699 = vlaneseq
    %v700 = vshrl.u32 %v699, 7
    %v701 = vsub.s32 %v698, %v700
    %v702 = vrot.slane %v695, %v701
    %v703 = vcombine.high %v702, %v702
    %v705 = vsel %vm251, %v683, %v703
    %s706 = scalar_lea.vmem [#allocation2], 3
    %707 = vst.msk [vmem:[%s706] ss:$8 sm:$0x3] %vm296, %v705
    %708 = vst.msk [vmem:[%s706] ss:$8 sm:$0x0] %vm296, %v705
    %v710 = vlaneseq
    %v711 = vshrl.u32 %v710, 7
    %v712 = vsub.s32 0, %v711
    %v713 = vrot.slane %v705, %v712
    %v714 = vlaneseq
    %v715 = vshrl.u32 %v714, 7
    %v716 = vsub.s32 1, %v715
    %v717 = vrot.slane %v705, %v716
    %720 = vmatprep.subr.mxu0 %v88
    %721 = vmatpush1.msra.mxu0 %v87
    %722 = vmatprep.subr.mxu0 %v90
    %723 = vmatpush1.msra.mxu0 %v89
    %724 = vmatprep.subr.mxu0 %v92
    %725 = vmatpush1.msra.mxu0 %v91
    %726 = vmatprep.subr.mxu0 %v94
    %727 = vmatpush1.msra.mxu0 %v93
    %728 = vmatprep.subr.mxu0 %v96
    %729 = vmatpush1.msra.mxu0 %v95
    %730 = vmatprep.subr.mxu0 %v98
    %731 = vmatpush1.msra.mxu0 %v97
    %732 = vmatprep.subr.mxu0 %v100
    %733 = vmatpush1.msra.mxu0 %v99
    %734 = vmatprep.subr.mxu0 %v102
    %735 = vmatpush1.msra.mxu0 %v101
    %736 = vmatprep.subr.mxu0 %v104
    %737 = vmatpush1.msra.mxu0 %v103
    %738 = vmatprep.subr.mxu0 %v106
    %739 = vmatpush1.msra.mxu0 %v105
    %740 = vmatprep.subr.mxu0 %v108
    %741 = vmatpush1.msra.mxu0 %v107
    %742 = vmatprep.subr.mxu0 %v110
    %743 = vmatpush1.msra.mxu0 %v109
    %744 = vmatprep.subr.mxu0 %v112
    %745 = vmatpush1.msra.mxu0 %v111
    %746 = vmatprep.subr.mxu0 %v114
    %747 = vmatpush1.msra.mxu0 %v113
    %748 = vmatprep.subr.mxu0 %v116
    %749 = vmatpush1.msra.mxu0 %v115
    %750 = vmatprep.subr.mxu0 %v118
    %751 = vmatpush1.msra.mxu0 %v117
    %752 = vmatprep.subr.mxu0 %v120
    %753 = vmatpush1.msra.mxu0 %v119
    %754 = vmatprep.subr.mxu0 %v122
    %755 = vmatpush1.msra.mxu0 %v121
    %756 = vmatprep.subr.mxu0 %v124
    %757 = vmatpush1.msra.mxu0 %v123
    %758 = vmatprep.subr.mxu0 %v126
    %759 = vmatpush1.msra.mxu0 %v125
    %760 = vmatprep.subr.mxu0 %v128
    %761 = vmatpush1.msra.mxu0 %v127
    %762 = vmatprep.subr.mxu0 %v130
    %763 = vmatpush1.msra.mxu0 %v129
    %764 = vmatprep.subr.mxu0 %v132
    %765 = vmatpush1.msra.mxu0 %v131
    %766 = vmatprep.subr.mxu0 %v134
    %767 = vmatpush1.msra.mxu0 %v133
    %768 = vmatprep.subr.mxu0 %v136
    %769 = vmatpush1.msra.mxu0 %v135
    %770 = vmatprep.subr.mxu0 %v138
    %771 = vmatpush1.msra.mxu0 %v137
    %772 = vmatprep.subr.mxu0 %v140
    %773 = vmatpush1.msra.mxu0 %v139
    %774 = vmatprep.subr.mxu0 %v142
    %775 = vmatpush1.msra.mxu0 %v141
    %776 = vmatprep.subr.mxu0 %v144
    %777 = vmatpush1.msra.mxu0 %v143
    %778 = vmatprep.subr.mxu0 %v146
    %779 = vmatpush1.msra.mxu0 %v145
    %780 = vmatprep.subr.mxu0 %v148
    %781 = vmatpush1.msra.mxu0 %v147
    %782 = vmatprep.subr.mxu0 %v150
    %783 = vmatpush1.msra.mxu0 %v149
    %784 = vmatprep.mubr.f32.mxu0 %v717
    %785 = vmatmul.mubr.f32.gmra.mrb[0].mxu0 %v713
    %v786 = vpop.f32.mrb[0].mxu0
    %v787 = vadd.f32 0.0, %v786
    %v788 = vpop.f32.mrb[0].mxu0
    %v789 = vadd.f32 0.0, %v788
    %790 = vdwg.mxu0
    %v793 = vrot.slane %v787, 4
    %v794 = vrot.slane %v789, 4
    %v797 = vadd.f32 %v247, %v793
    %v798 = vadd.f32 %v249, %v794
    %v799 = vmax.f32 %v797, 0.0
    %v800 = vmax.f32 %v798, 0.0
    %v801 = vtanh.pop %v797
    %v802 = vtanh.pop %v798
    %v805 = vcombine.high %v799, %v800
    %v807 = vunpack.c.l.s4 1966171168
    %v808 = vunpack.c.0.s8 %v807
    %v809 = vlaneseq
    %v810 = vshrl.u32 %v809, 7
    %v811 = vsub.s32 %v808, %v810
    %v812 = vrot.slane %v805, %v811
    %v814 = vunpack.c.l.s4 1966171168
    %v815 = vunpack.c.0.s8 %v814
    %v816 = vlaneseq
    %v817 = vshrl.u32 %v816, 7
    %v818 = vsub.s32 %v815, %v817
    %v819 = vrot.slane %v812, %v818
    %v823 = vcombine.high %v801, %v802
    %v825 = vunpack.c.l.s4 1966171168
    %v826 = vunpack.c.0.s8 %v825
    %v827 = vlaneseq
    %v828 = vshrl.u32 %v827, 7
    %v829 = vsub.s32 %v826, %v828
    %v830 = vrot.slane %v823, %v829
    %v832 = vunpack.c.l.s4 1966171168
    %v833 = vunpack.c.0.s8 %v832
    %v834 = vlaneseq
    %v835 = vshrl.u32 %v834, 7
    %v836 = vsub.s32 %v833, %v835
    %v837 = vrot.slane %v830, %v836
    %v839 = vsel %vm251, %v819, %v837
    %s840 = scalar_lea.vmem [#allocation2], 4
    %841 = vst.msk [vmem:[%s840] ss:$8 sm:$0x3] %vm296, %v839
    %842 = vst.msk [vmem:[%s840] ss:$8 sm:$0x0] %vm296, %v839
    %v844 = vlaneseq
    %v845 = vshrl.u32 %v844, 7
    %v846 = vsub.s32 0, %v845
    %v847 = vrot.slane %v839, %v846
    %v848 = vlaneseq
    %v849 = vshrl.u32 %v848, 7
    %v850 = vsub.s32 1, %v849
    %v851 = vrot.slane %v839, %v850
    %854 = vmatprep.subr.mxu0 %v88
    %855 = vmatpush1.msra.mxu0 %v87
    %856 = vmatprep.subr.mxu0 %v90
    %857 = vmatpush1.msra.mxu0 %v89
    %858 = vmatprep.subr.mxu0 %v92
    %859 = vmatpush1.msra.mxu0 %v91
    %860 = vmatprep.subr.mxu0 %v94
    %861 = vmatpush1.msra.mxu0 %v93
    %862 = vmatprep.subr.mxu0 %v96
    %863 = vmatpush1.msra.mxu0 %v95
    %864 = vmatprep.subr.mxu0 %v98
    %865 = vmatpush1.msra.mxu0 %v97
    %866 = vmatprep.subr.mxu0 %v100
    %867 = vmatpush1.msra.mxu0 %v99
    %868 = vmatprep.subr.mxu0 %v102
    %869 = vmatpush1.msra.mxu0 %v101
    %870 = vmatprep.subr.mxu0 %v104
    %871 = vmatpush1.msra.mxu0 %v103
    %872 = vmatprep.subr.mxu0 %v106
    %873 = vmatpush1.msra.mxu0 %v105
    %874 = vmatprep.subr.mxu0 %v108
    %875 = vmatpush1.msra.mxu0 %v107
    %876 = vmatprep.subr.mxu0 %v110
    %877 = vmatpush1.msra.mxu0 %v109
    %878 = vmatprep.subr.mxu0 %v112
    %879 = vmatpush1.msra.mxu0 %v111
    %880 = vmatprep.subr.mxu0 %v114
    %881 = vmatpush1.msra.mxu0 %v113
    %882 = vmatprep.subr.mxu0 %v116
    %883 = vmatpush1.msra.mxu0 %v115
    %884 = vmatprep.subr.mxu0 %v118
    %885 = vmatpush1.msra.mxu0 %v117
    %886 = vmatprep.subr.mxu0 %v120
    %887 = vmatpush1.msra.mxu0 %v119
    %888 = vmatprep.subr.mxu0 %v122
    %889 = vmatpush1.msra.mxu0 %v121
    %890 = vmatprep.subr.mxu0 %v124
    %891 = vmatpush1.msra.mxu0 %v123
    %892 = vmatprep.subr.mxu0 %v126
    %893 = vmatpush1.msra.mxu0 %v125
    %894 = vmatprep.subr.mxu0 %v128
    %895 = vmatpush1.msra.mxu0 %v127
    %896 = vmatprep.subr.mxu0 %v130
    %897 = vmatpush1.msra.mxu0 %v129
    %898 = vmatprep.subr.mxu0 %v132
    %899 = vmatpush1.msra.mxu0 %v131
    %900 = vmatprep.subr.mxu0 %v134
    %901 = vmatpush1.msra.mxu0 %v133
    %902 = vmatprep.subr.mxu0 %v136
    %903 = vmatpush1.msra.mxu0 %v135
    %904 = vmatprep.subr.mxu0 %v138
    %905 = vmatpush1.msra.mxu0 %v137
    %906 = vmatprep.subr.mxu0 %v140
    %907 = vmatpush1.msra.mxu0 %v139
    %908 = vmatprep.subr.mxu0 %v142
    %909 = vmatpush1.msra.mxu0 %v141
    %910 = vmatprep.subr.mxu0 %v144
    %911 = vmatpush1.msra.mxu0 %v143
    %912 = vmatprep.subr.mxu0 %v146
    %913 = vmatpush1.msra.mxu0 %v145
    %914 = vmatprep.subr.mxu0 %v148
    %915 = vmatpush1.msra.mxu0 %v147
    %916 = vmatprep.subr.mxu0 %v150
    %917 = vmatpush1.msra.mxu0 %v149
    %918 = vmatprep.mubr.f32.mxu0 %v851
    %919 = vmatmul.mubr.f32.gmra.mrb[0].mxu0 %v847
    %v920 = vpop.f32.mrb[0].mxu0
    %v921 = vadd.f32 0.0, %v920
    %v922 = vpop.f32.mrb[0].mxu0
    %v923 = vadd.f32 0.0, %v922
    %924 = vdwg.mxu0
    %v927 = vrot.slane %v921, 3
    %v928 = vrot.slane %v923, 3
    %v931 = vadd.f32 %v247, %v927
    %v932 = vadd.f32 %v249, %v928
    %v933 = vmax.f32 %v931, 0.0
    %v934 = vmax.f32 %v932, 0.0
    %v935 = vtanh.pop %v931
    %v936 = vtanh.pop %v932
    %v939 = vcombine.high %v933, %v934
    %v941 = vunpack.c.l.s4 1966171168
    %v942 = vunpack.c.0.s8 %v941
    %v943 = vlaneseq
    %v944 = vshrl.u32 %v943, 7
    %v945 = vsub.s32 %v942, %v944
    %v946 = vrot.slane %v939, %v945
    %v947 = vcombine.high %v946, %v946
    %v949 = vunpack.c.l.s4 1966171168
    %v950 = vunpack.c.0.s8 %v949
    %v951 = vlaneseq
    %v952 = vshrl.u32 %v951, 7
    %v953 = vsub.s32 %v950, %v952
    %v954 = vrot.slane %v947, %v953
    %v958 = vcombine.high %v935, %v936
    %v960 = vunpack.c.l.s4 1966171168
    %v961 = vunpack.c.0.s8 %v960
    %v962 = vlaneseq
    %v963 = vshrl.u32 %v962, 7
    %v964 = vsub.s32 %v961, %v963
    %v965 = vrot.slane %v958, %v964
    %v966 = vcombine.high %v965, %v965
    %v968 = vunpack.c.l.s4 1966171168
    %v969 = vunpack.c.0.s8 %v968
    %v970 = vlaneseq
    %v971 = vshrl.u32 %v970, 7
    %v972 = vsub.s32 %v969, %v971
    %v973 = vrot.slane %v966, %v972
    %v975 = vsel %vm251, %v954, %v973
    %s976 = scalar_lea.vmem [#allocation2], 5
    %977 = vst.msk [vmem:[%s976] ss:$8 sm:$0x3] %vm296, %v975
    %978 = vst.msk [vmem:[%s976] ss:$8 sm:$0x0] %vm296, %v975
    %v980 = vlaneseq
    %v981 = vshrl.u32 %v980, 7
    %v982 = vsub.s32 0, %v981
    %v983 = vrot.slane %v975, %v982
    %v984 = vlaneseq
    %v985 = vshrl.u32 %v984, 7
    %v986 = vsub.s32 1, %v985
    %v987 = vrot.slane %v975, %v986
    %990 = vmatprep.subr.mxu0 %v88
    %991 = vmatpush1.msra.mxu0 %v87
    %992 = vmatprep.subr.mxu0 %v90
    %993 = vmatpush1.msra.mxu0 %v89
    %994 = vmatprep.subr.mxu0 %v92
    %995 = vmatpush1.msra.mxu0 %v91
    %996 = vmatprep.subr.mxu0 %v94
    %997 = vmatpush1.msra.mxu0 %v93
    %998 = vmatprep.subr.mxu0 %v96
    %999 = vmatpush1.msra.mxu0 %v95
    %1000 = vmatprep.subr.mxu0 %v98
    %1001 = vmatpush1.msra.mxu0 %v97
    %1002 = vmatprep.subr.mxu0 %v100
    %1003 = vmatpush1.msra.mxu0 %v99
    %1004 = vmatprep.subr.mxu0 %v102
    %1005 = vmatpush1.msra.mxu0 %v101
    %1006 = vmatprep.subr.mxu0 %v104
    %1007 = vmatpush1.msra.mxu0 %v103
    %1008 = vmatprep.subr.mxu0 %v106
    %1009 = vmatpush1.msra.mxu0 %v105
    %1010 = vmatprep.subr.mxu0 %v108
    %1011 = vmatpush1.msra.mxu0 %v107
    %1012 = vmatprep.subr.mxu0 %v110
    %1013 = vmatpush1.msra.mxu0 %v109
    %1014 = vmatprep.subr.mxu0 %v112
    %1015 = vmatpush1.msra.mxu0 %v111
    %1016 = vmatprep.subr.mxu0 %v114
    %1017 = vmatpush1.msra.mxu0 %v113
    %1018 = vmatprep.subr.mxu0 %v116
    %1019 = vmatpush1.msra.mxu0 %v115
    %1020 = vmatprep.subr.mxu0 %v118
    %1021 = vmatpush1.msra.mxu0 %v117
    %1022 = vmatprep.subr.mxu0 %v120
    %1023 = vmatpush1.msra.mxu0 %v119
    %1024 = vmatprep.subr.mxu0 %v122
    %1025 = vmatpush1.msra.mxu0 %v121
    %1026 = vmatprep.subr.mxu0 %v124
    %1027 = vmatpush1.msra.mxu0 %v123
    %1028 = vmatprep.subr.mxu0 %v126
    %1029 = vmatpush1.msra.mxu0 %v125
    %1030 = vmatprep.subr.mxu0 %v128
    %1031 = vmatpush1.msra.mxu0 %v127
    %1032 = vmatprep.subr.mxu0 %v130
    %1033 = vmatpush1.msra.mxu0 %v129
    %1034 = vmatprep.subr.mxu0 %v132
    %1035 = vmatpush1.msra.mxu0 %v131
    %1036 = vmatprep.subr.mxu0 %v134
    %1037 = vmatpush1.msra.mxu0 %v133
    %1038 = vmatprep.subr.mxu0 %v136
    %1039 = vmatpush1.msra.mxu0 %v135
    %1040 = vmatprep.subr.mxu0 %v138
    %1041 = vmatpush1.msra.mxu0 %v137
    %1042 = vmatprep.subr.mxu0 %v140
    %1043 = vmatpush1.msra.mxu0 %v139
    %1044 = vmatprep.subr.mxu0 %v142
    %1045 = vmatpush1.msra.mxu0 %v141
    %1046 = vmatprep.subr.mxu0 %v144
    %1047 = vmatpush1.msra.mxu0 %v143
    %1048 = vmatprep.subr.mxu0 %v146
    %1049 = vmatpush1.msra.mxu0 %v145
    %1050 = vmatprep.subr.mxu0 %v148
    %1051 = vmatpush1.msra.mxu0 %v147
    %1052 = vmatprep.subr.mxu0 %v150
    %1053 = vmatpush1.msra.mxu0 %v149
    %1054 = vmatprep.mubr.f32.mxu0 %v987
    %1055 = vmatmul.mubr.f32.gmra.mrb[0].mxu0 %v983
    %v1056 = vpop.f32.mrb[0].mxu0
    %v1057 = vadd.f32 0.0, %v1056
    %v1058 = vpop.f32.mrb[0].mxu0
    %v1059 = vadd.f32 0.0, %v1058
    %1060 = vdwg.mxu0
    %v1063 = vrot.slane %v1057, 2
    %v1064 = vrot.slane %v1059, 2
    %v1067 = vadd.f32 %v247, %v1063
    %v1068 = vadd.f32 %v249, %v1064
    %v1069 = vmax.f32 %v1067, 0.0
    %v1070 = vmax.f32 %v1068, 0.0
    %v1071 = vtanh.pop %v1067
    %v1072 = vtanh.pop %v1068
    %v1075 = vcombine.high %v1069, %v1070
    %v1077 = vunpack.c.l.s4 1966171168
    %v1078 = vunpack.c.0.s8 %v1077
    %v1079 = vlaneseq
    %v1080 = vshrl.u32 %v1079, 7
    %v1081 = vsub.s32 %v1078, %v1080
    %v1082 = vrot.slane %v1075, %v1081
    %v1084 = vunpack.c.l.s4 1966171168
    %v1085 = vunpack.c.0.s8 %v1084
    %v1086 = vlaneseq
    %v1087 = vshrl.u32 %v1086, 7
    %v1088 = vsub.s32 %v1085, %v1087
    %v1089 = vrot.slane %v1082, %v1088
    %v1090 = vcombine.high %v1089, %v1089
    %v1094 = vcombine.high %v1071, %v1072
    %v1096 = vunpack.c.l.s4 1966171168
    %v1097 = vunpack.c.0.s8 %v1096
    %v1098 = vlaneseq
    %v1099 = vshrl.u32 %v1098, 7
    %v1100 = vsub.s32 %v1097, %v1099
    %v1101 = vrot.slane %v1094, %v1100
    %v1103 = vunpack.c.l.s4 1966171168
    %v1104 = vunpack.c.0.s8 %v1103
    %v1105 = vlaneseq
    %v1106 = vshrl.u32 %v1105, 7
    %v1107 = vsub.s32 %v1104, %v1106
    %v1108 = vrot.slane %v1101, %v1107
    %v1109 = vcombine.high %v1108, %v1108
    %v1111 = vsel %vm251, %v1090, %v1109
    %s1112 = scalar_lea.vmem [#allocation2], 6
    %1113 = vst.msk [vmem:[%s1112] ss:$8 sm:$0x3] %vm296, %v1111
    %1114 = vst.msk [vmem:[%s1112] ss:$8 sm:$0x0] %vm296, %v1111
    %v1116 = vlaneseq
    %v1117 = vshrl.u32 %v1116, 7
    %v1118 = vsub.s32 0, %v1117
    %v1119 = vrot.slane %v1111, %v1118
    %v1120 = vlaneseq
    %v1121 = vshrl.u32 %v1120, 7
    %v1122 = vsub.s32 1, %v1121
    %v1123 = vrot.slane %v1111, %v1122
    %1126 = vmatprep.subr.mxu0 %v88
    %1127 = vmatpush1.msra.mxu0 %v87
    %1128 = vmatprep.subr.mxu0 %v90
    %1129 = vmatpush1.msra.mxu0 %v89
    %1130 = vmatprep.subr.mxu0 %v92
    %1131 = vmatpush1.msra.mxu0 %v91
    %1132 = vmatprep.subr.mxu0 %v94
    %1133 = vmatpush1.msra.mxu0 %v93
    %1134 = vmatprep.subr.mxu0 %v96
    %1135 = vmatpush1.msra.mxu0 %v95
    %1136 = vmatprep.subr.mxu0 %v98
    %1137 = vmatpush1.msra.mxu0 %v97
    %1138 = vmatprep.subr.mxu0 %v100
    %1139 = vmatpush1.msra.mxu0 %v99
    %1140 = vmatprep.subr.mxu0 %v102
    %1141 = vmatpush1.msra.mxu0 %v101
    %1142 = vmatprep.subr.mxu0 %v104
    %1143 = vmatpush1.msra.mxu0 %v103
    %1144 = vmatprep.subr.mxu0 %v106
    %1145 = vmatpush1.msra.mxu0 %v105
    %1146 = vmatprep.subr.mxu0 %v108
    %1147 = vmatpush1.msra.mxu0 %v107
    %1148 = vmatprep.subr.mxu0 %v110
    %1149 = vmatpush1.msra.mxu0 %v109
    %1150 = vmatprep.subr.mxu0 %v112
    %1151 = vmatpush1.msra.mxu0 %v111
    %1152 = vmatprep.subr.mxu0 %v114
    %1153 = vmatpush1.msra.mxu0 %v113
    %1154 = vmatprep.subr.mxu0 %v116
    %1155 = vmatpush1.msra.mxu0 %v115
    %1156 = vmatprep.subr.mxu0 %v118
    %1157 = vmatpush1.msra.mxu0 %v117
    %1158 = vmatprep.subr.mxu0 %v120
    %1159 = vmatpush1.msra.mxu0 %v119
    %1160 = vmatprep.subr.mxu0 %v122
    %1161 = vmatpush1.msra.mxu0 %v121
    %1162 = vmatprep.subr.mxu0 %v124
    %1163 = vmatpush1.msra.mxu0 %v123
    %1164 = vmatprep.subr.mxu0 %v126
    %1165 = vmatpush1.msra.mxu0 %v125
    %1166 = vmatprep.subr.mxu0 %v128
    %1167 = vmatpush1.msra.mxu0 %v127
    %1168 = vmatprep.subr.mxu0 %v130
    %1169 = vmatpush1.msra.mxu0 %v129
    %1170 = vmatprep.subr.mxu0 %v132
    %1171 = vmatpush1.msra.mxu0 %v131
    %1172 = vmatprep.subr.mxu0 %v134
    %1173 = vmatpush1.msra.mxu0 %v133
    %1174 = vmatprep.subr.mxu0 %v136
    %1175 = vmatpush1.msra.mxu0 %v135
    %1176 = vmatprep.subr.mxu0 %v138
    %1177 = vmatpush1.msra.mxu0 %v137
    %1178 = vmatprep.subr.mxu0 %v140
    %1179 = vmatpush1.msra.mxu0 %v139
    %1180 = vmatprep.subr.mxu0 %v142
    %1181 = vmatpush1.msra.mxu0 %v141
    %1182 = vmatprep.subr.mxu0 %v144
    %1183 = vmatpush1.msra.mxu0 %v143
    %1184 = vmatprep.subr.mxu0 %v146
    %1185 = vmatpush1.msra.mxu0 %v145
    %1186 = vmatprep.subr.mxu0 %v148
    %1187 = vmatpush1.msra.mxu0 %v147
    %1188 = vmatprep.subr.mxu0 %v150
    %1189 = vmatpush1.msra.mxu0 %v149
    %1190 = vmatprep.mubr.f32.mxu0 %v1123
    %1191 = vmatmul.mubr.f32.gmra.mrb[0].mxu0 %v1119
    %v1192 = vpop.f32.mrb[0].mxu0
    %v1193 = vadd.f32 0.0, %v1192
    %v1194 = vpop.f32.mrb[0].mxu0
    %v1195 = vadd.f32 0.0, %v1194
    %1196 = vdwg.mxu0
    %v1199 = vrot.slane %v1193, 1
    %v1200 = vrot.slane %v1195, 1
    %v1203 = vadd.f32 %v247, %v1199
    %v1204 = vadd.f32 %v249, %v1200
    %v1205 = vmax.f32 %v1203, 0.0
    %v1206 = vmax.f32 %v1204, 0.0
    %v1207 = vtanh.pop %v1203
    %v1208 = vtanh.pop %v1204
    %v1211 = vcombine.high %v1205, %v1206
    %v1213 = vunpack.c.l.s4 1966171168
    %v1214 = vunpack.c.0.s8 %v1213
    %v1215 = vlaneseq
    %v1216 = vshrl.u32 %v1215, 7
    %v1217 = vsub.s32 %v1214, %v1216
    %v1218 = vrot.slane %v1211, %v1217
    %v1219 = vcombine.high %v1218, %v1218
    %v1221 = vunpack.c.l.s4 1966171168
    %v1222 = vunpack.c.0.s8 %v1221
    %v1223 = vlaneseq
    %v1224 = vshrl.u32 %v1223, 7
    %v1225 = vsub.s32 %v1222, %v1224
    %v1226 = vrot.slane %v1219, %v1225
    %v1227 = vcombine.high %v1226, %v1226
    %v1231 = vcombine.high %v1207, %v1208
    %v1233 = vunpack.c.l.s4 1966171168
    %v1234 = vunpack.c.0.s8 %v1233
    %v1235 = vlaneseq
    %v1236 = vshrl.u32 %v1235, 7
    %v1237 = vsub.s32 %v1234, %v1236
    %v1238 = vrot.slane %v1231, %v1237
    %v1239 = vcombine.high %v1238, %v1238
    %v1241 = vunpack.c.l.s4 1966171168
    %v1242 = vunpack.c.0.s8 %v1241
    %v1243 = vlaneseq
    %v1244 = vshrl.u32 %v1243, 7
    %v1245 = vsub.s32 %v1242, %v1244
    %v1246 = vrot.slane %v1239, %v1245
    %v1247 = vcombine.high %v1246, %v1246
    %v1249 = vsel %vm251, %v1227, %v1247
    %s1250 = scalar_lea.vmem [#allocation2], 7
    %1251 = vst.msk [vmem:[%s1250] ss:$8 sm:$0x3] %vm296, %v1249
    %1252 = vst.msk [vmem:[%s1250] ss:$8 sm:$0x0] %vm296, %v1249
    %v1253 = vld [vmem:[#allocation2] sm:$0xff]
    %v1254 = vld [vmem:[#allocation2 + $0x8] sm:$0xff]
    %v1255 = vld [vmem:[#allocation6] sm:$0xff]
    %v1256 = vld [vmem:[#allocation6 + $0x8] sm:$0xff]
    %v1257 = vld [vmem:[#allocation6 + $0x10] sm:$0xff]
    %v1258 = vld [vmem:[#allocation6 + $0x18] sm:$0xff]
    %v1259 = vld [vmem:[#allocation6 + $0x20] sm:$0xff]
    %v1260 = vld [vmem:[#allocation6 + $0x28] sm:$0xff]
    %v1261 = vld [vmem:[#allocation6 + $0x30] sm:$0xff]
    %v1262 = vld [vmem:[#allocation6 + $0x38] sm:$0xff]
    %v1263 = vld [vmem:[#allocation6 + $0x40] sm:$0xff]
    %v1264 = vld [vmem:[#allocation6 + $0x48] sm:$0xff]
    %v1265 = vld [vmem:[#allocation6 + $0x50] sm:$0xff]
    %v1266 = vld [vmem:[#allocation6 + $0x58] sm:$0xff]
    %v1267 = vld [vmem:[#allocation6 + $0x60] sm:$0xff]
    %v1268 = vld [vmem:[#allocation6 + $0x68] sm:$0xff]
    %v1269 = vld [vmem:[#allocation6 + $0x70] sm:$0xff]
    %v1270 = vld [vmem:[#allocation6 + $0x78] sm:$0xff]
    %v1271 = vld [vmem:[#allocation6 + $0x80] sm:$0xff]
    %v1272 = vld [vmem:[#allocation6 + $0x88] sm:$0xff]
    %v1273 = vld [vmem:[#allocation6 + $0x90] sm:$0xff]
    %v1274 = vld [vmem:[#allocation6 + $0x98] sm:$0xff]
    %v1275 = vld [vmem:[#allocation6 + $0xa0] sm:$0xff]
    %v1276 = vld [vmem:[#allocation6 + $0xa8] sm:$0xff]
    %v1277 = vld [vmem:[#allocation6 + $0xb0] sm:$0xff]
    %v1278 = vld [vmem:[#allocation6 + $0xb8] sm:$0xff]
    %v1279 = vld [vmem:[#allocation6 + $0xc0] sm:$0xff]
    %v1280 = vld [vmem:[#allocation6 + $0xc8] sm:$0xff]
    %v1281 = vld [vmem:[#allocation6 + $0xd0] sm:$0xff]
    %v1282 = vld [vmem:[#allocation6 + $0xd8] sm:$0xff]
    %v1283 = vld [vmem:[#allocation6 + $0xe0] sm:$0xff]
    %v1284 = vld [vmem:[#allocation6 + $0xe8] sm:$0xff]
    %v1285 = vld [vmem:[#allocation6 + $0xf0] sm:$0xff]
    %v1286 = vld [vmem:[#allocation6 + $0xf8] sm:$0xff]
    %1287 = vmatprep.subr.mxu0 0.0
    %1288 = vmatpush1.msra.mxu0 %v1255
    %1289 = vmatprep.subr.mxu0 0.0
    %1290 = vmatpush1.msra.mxu0 %v1256
    %1291 = vmatprep.subr.mxu0 0.0
    %1292 = vmatpush1.msra.mxu0 %v1257
    %1293 = vmatprep.subr.mxu0 0.0
    %1294 = vmatpush1.msra.mxu0 %v1258
    %1295 = vmatprep.subr.mxu0 0.0
    %1296 = vmatpush1.msra.mxu0 %v1259
    %1297 = vmatprep.subr.mxu0 0.0
    %1298 = vmatpush1.msra.mxu0 %v1260
    %1299 = vmatprep.subr.mxu0 0.0
    %1300 = vmatpush1.msra.mxu0 %v1261
    %1301 = vmatprep.subr.mxu0 0.0
    %1302 = vmatpush1.msra.mxu0 %v1262
    %1303 = vmatprep.subr.mxu0 0.0
    %1304 = vmatpush1.msra.mxu0 %v1263
    %1305 = vmatprep.subr.mxu0 0.0
    %1306 = vmatpush1.msra.mxu0 %v1264
    %1307 = vmatprep.subr.mxu0 0.0
    %1308 = vmatpush1.msra.mxu0 %v1265
    %1309 = vmatprep.subr.mxu0 0.0
    %1310 = vmatpush1.msra.mxu0 %v1266
    %1311 = vmatprep.subr.mxu0 0.0
    %1312 = vmatpush1.msra.mxu0 %v1267
    %1313 = vmatprep.subr.mxu0 0.0
    %1314 = vmatpush1.msra.mxu0 %v1268
    %1315 = vmatprep.subr.mxu0 0.0
    %1316 = vmatpush1.msra.mxu0 %v1269
    %1317 = vmatprep.subr.mxu0 0.0
    %1318 = vmatpush1.msra.mxu0 %v1270
    %1319 = vmatprep.subr.mxu0 0.0
    %1320 = vmatpush1.msra.mxu0 %v1271
    %1321 = vmatprep.subr.mxu0 0.0
    %1322 = vmatpush1.msra.mxu0 %v1272
    %1323 = vmatprep.subr.mxu0 0.0
    %1324 = vmatpush1.msra.mxu0 %v1273
    %1325 = vmatprep.subr.mxu0 0.0
    %1326 = vmatpush1.msra.mxu0 %v1274
    %1327 = vmatprep.subr.mxu0 0.0
    %1328 = vmatpush1.msra.mxu0 %v1275
    %1329 = vmatprep.subr.mxu0 0.0
    %1330 = vmatpush1.msra.mxu0 %v1276
    %1331 = vmatprep.subr.mxu0 0.0
    %1332 = vmatpush1.msra.mxu0 %v1277
    %1333 = vmatprep.subr.mxu0 0.0
    %1334 = vmatpush1.msra.mxu0 %v1278
    %1335 = vmatprep.subr.mxu0 0.0
    %1336 = vmatpush1.msra.mxu0 %v1279
    %1337 = vmatprep.subr.mxu0 0.0
    %1338 = vmatpush1.msra.mxu0 %v1280
    %1339 = vmatprep.subr.mxu0 0.0
    %1340 = vmatpush1.msra.mxu0 %v1281
    %1341 = vmatprep.subr.mxu0 0.0
    %1342 = vmatpush1.msra.mxu0 %v1282
    %1343 = vmatprep.subr.mxu0 0.0
    %1344 = vmatpush1.msra.mxu0 %v1283
    %1345 = vmatprep.subr.mxu0 0.0
    %1346 = vmatpush1.msra.mxu0 %v1284
    %1347 = vmatprep.subr.mxu0 0.0
    %1348 = vmatpush1.msra.mxu0 %v1285
    %1349 = vmatprep.subr.mxu0 0.0
    %1350 = vmatpush1.msra.mxu0 %v1286
    %1351 = vmatprep.mubr.f32.mxu0 %v1254
    %1352 = vmatmul.mubr.f32.gmra.mrb[0].mxu0 %v1253
    %v1353 = vpop.f32.mrb[0].mxu0
    %v1354 = vadd.f32 0.0, %v1353
    %v1355 = vpop.f32.mrb[0].mxu0
    %1356 = vdwg.mxu0
    %v1357 = vld [vmem:[%s6] sm:$0xff]
    %v1358 = vld [vmem:[%s6 + $0x8] sm:$0xff]
    %v1359 = vld [vmem:[%s6 + $0x10] sm:$0xff]
    %v1360 = vld [vmem:[%s6 + $0x18] sm:$0xff]
    %v1361 = vld [vmem:[%s6 + $0x20] sm:$0xff]
    %v1362 = vld [vmem:[%s6 + $0x28] sm:$0xff]
    %v1363 = vld [vmem:[%s6 + $0x30] sm:$0xff]
    %v1364 = vld [vmem:[%s6 + $0x38] sm:$0xff]
    %v1365 = vld [vmem:[%s6 + $0x40] sm:$0xff]
    %v1366 = vld [vmem:[%s6 + $0x48] sm:$0xff]
    %v1367 = vld [vmem:[%s6 + $0x50] sm:$0xff]
    %v1368 = vld [vmem:[%s6 + $0x58] sm:$0xff]
    %v1369 = vld [vmem:[%s6 + $0x60] sm:$0xff]
    %v1370 = vld [vmem:[%s6 + $0x68] sm:$0xff]
    %v1371 = vld [vmem:[%s6 + $0x70] sm:$0xff]
    %v1372 = vld [vmem:[%s6 + $0x78] sm:$0xff]
    %v1373 = vld [vmem:[%s6 + $0x80] sm:$0xff]
    %v1374 = vld [vmem:[%s6 + $0x88] sm:$0xff]
    %v1375 = vld [vmem:[%s6 + $0x90] sm:$0xff]
    %v1376 = vld [vmem:[%s6 + $0x98] sm:$0xff]
    %v1377 = vld [vmem:[%s6 + $0xa0] sm:$0xff]
    %v1378 = vld [vmem:[%s6 + $0xa8] sm:$0xff]
    %v1379 = vld [vmem:[%s6 + $0xb0] sm:$0xff]
    %v1380 = vld [vmem:[%s6 + $0xb8] sm:$0xff]
    %v1381 = vld [vmem:[%s6 + $0xc0] sm:$0xff]
    %v1382 = vld [vmem:[%s6 + $0xc8] sm:$0xff]
    %v1383 = vld [vmem:[%s6 + $0xd0] sm:$0xff]
    %v1384 = vld [vmem:[%s6 + $0xd8] sm:$0xff]
    %v1385 = vld [vmem:[%s6 + $0xe0] sm:$0xff]
    %v1386 = vld [vmem:[%s6 + $0xe8] sm:$0xff]
    %v1387 = vld [vmem:[%s6 + $0xf0] sm:$0xff]
    %v1388 = vld [vmem:[%s6 + $0xf8] sm:$0xff]
    %v1389 = vld [vmem:[%s7] sm:$0xf]
    %v1391 = vlaneseq
    %v1392 = vshrl.u32 %v1391, 7
    %v1393 = vsub.s32 0, %v1392
    %v1394 = vrot.slane %v1389, %v1393
    %v1395 = vlaneseq
    %v1396 = vshrl.u32 %v1395, 7
    %v1397 = vsub.s32 1, %v1396
    %v1398 = vrot.slane %v1389, %v1397
    %v1399 = vlaneseq
    %v1400 = vshrl.u32 %v1399, 7
    %v1401 = vsub.s32 2, %v1400
    %v1402 = vrot.slane %v1389, %v1401
    %v1403 = vlaneseq
    %v1404 = vshrl.u32 %v1403, 7
    %v1405 = vsub.s32 3, %v1404
    %v1406 = vrot.slane %v1389, %v1405
    %vm1411 = vcmask 523264
    %v1413 = vsel %vm1411, %v1354, 0
    %1415 = vmatprep.subr.mxu0 %v1358
    %1416 = vmatpush1.msra.mxu0 %v1357
    %1417 = vmatprep.subr.mxu0 %v1362
    %1418 = vmatpush1.msra.mxu0 %v1361
    %1419 = vmatprep.subr.mxu0 %v1366
    %1420 = vmatpush1.msra.mxu0 %v1365
    %1421 = vmatprep.subr.mxu0 %v1370
    %1422 = vmatpush1.msra.mxu0 %v1369
    %1423 = vmatprep.subr.mxu0 %v1374
    %1424 = vmatpush1.msra.mxu0 %v1373
    %1425 = vmatprep.subr.mxu0 %v1378
    %1426 = vmatpush1.msra.mxu0 %v1377
    %1427 = vmatprep.subr.mxu0 %v1382
    %1428 = vmatpush1.msra.mxu0 %v1381
    %1429 = vmatprep.subr.mxu0 %v1386
    %1430 = vmatpush1.msra.mxu0 %v1385
    %1431 = vmatprep.subr.mxu0 0.0
    %1432 = vmatpush1.msra.mxu0 0.0
    %1433 = vmatprep.subr.mxu0 0.0
    %1434 = vmatpush1.msra.mxu0 0.0
    %1435 = vmatprep.subr.mxu0 0.0
    %1436 = vmatpush1.msra.mxu0 0.0
    %1437 = vmatprep.subr.mxu0 0.0
    %1438 = vmatpush1.msra.mxu0 0.0
    %1439 = vmatprep.subr.mxu0 0.0
    %1440 = vmatpush1.msra.mxu0 0.0
    %1441 = vmatprep.subr.mxu0 0.0
    %1442 = vmatpush1.msra.mxu0 0.0
    %1443 = vmatprep.subr.mxu0 0.0
    %1444 = vmatpush1.msra.mxu0 0.0
    %1445 = vmatprep.subr.mxu0 0.0
    %1446 = vmatpush1.msra.mxu0 0.0
    %1447 = vmatprep.subr.mxu0 0.0
    %1448 = vmatpush1.msra.mxu0 0.0
    %1449 = vmatprep.subr.mxu0 0.0
    %1450 = vmatpush1.msra.mxu0 0.0
    %1451 = vmatprep.subr.mxu0 0.0
    %1452 = vmatpush1.msra.mxu0 0.0
    %1453 = vmatprep.subr.mxu0 0.0
    %1454 = vmatpush1.msra.mxu0 0.0
    %1455 = vmatprep.subr.mxu0 0.0
    %1456 = vmatpush1.msra.mxu0 0.0
    %1457 = vmatprep.subr.mxu0 0.0
    %1458 = vmatpush1.msra.mxu0 0.0
    %1459 = vmatprep.subr.mxu0 0.0
    %1460 = vmatpush1.msra.mxu0 0.0
    %1461 = vmatprep.subr.mxu0 0.0
    %1462 = vmatpush1.msra.mxu0 0.0
    %1463 = vmatprep.subr.mxu0 0.0
    %1464 = vmatpush1.msra.mxu0 0.0
    %1465 = vmatprep.subr.mxu0 0.0
    %1466 = vmatpush1.msra.mxu0 0.0
    %1467 = vmatprep.subr.mxu0 0.0
    %1468 = vmatpush1.msra.mxu0 0.0
    %1469 = vmatprep.subr.mxu0 0.0
    %1470 = vmatpush1.msra.mxu0 0.0
    %1471 = vmatprep.subr.mxu0 0.0
    %1472 = vmatpush1.msra.mxu0 0.0
    %1473 = vmatprep.subr.mxu0 0.0
    %1474 = vmatpush1.msra.mxu0 0.0
    %1475 = vmatprep.subr.mxu0 0.0
    %1476 = vmatpush1.msra.mxu0 0.0
    %1477 = vmatprep.subr.mxu0 0.0
    %1478 = vmatpush1.msra.mxu0 0.0
    %1479 = vmatprep.mubr.f32.mxu0 0.0
    %1480 = vmatmul.mubr.f32.gmra.mrb[0].mxu0 %v1413
    %v1481 = vpop.f32.mrb[0].mxu0
    %v1482 = vadd.f32 %v1394, %v1481
    %v1483 = vpop.f32.mrb[0].mxu0
    %v1484 = vadd.f32 %v1398, %v1483
    %1485 = vdwg.mxu0
    %1486 = vmatprep.subr.mxu0 %v1360
    %1487 = vmatpush1.msra.mxu0 %v1359
    %1488 = vmatprep.subr.mxu0 %v1364
    %1489 = vmatpush1.msra.mxu0 %v1363
    %1490 = vmatprep.subr.mxu0 %v1368
    %1491 = vmatpush1.msra.mxu0 %v1367
    %1492 = vmatprep.subr.mxu0 %v1372
    %1493 = vmatpush1.msra.mxu0 %v1371
    %1494 = vmatprep.subr.mxu0 %v1376
    %1495 = vmatpush1.msra.mxu0 %v1375
    %1496 = vmatprep.subr.mxu0 %v1380
    %1497 = vmatpush1.msra.mxu0 %v1379
    %1498 = vmatprep.subr.mxu0 %v1384
    %1499 = vmatpush1.msra.mxu0 %v1383
    %1500 = vmatprep.subr.mxu0 %v1388
    %1501 = vmatpush1.msra.mxu0 %v1387
    %1502 = vmatprep.subr.mxu0 0.0
    %1503 = vmatpush1.msra.mxu0 0.0
    %1504 = vmatprep.subr.mxu0 0.0
    %1505 = vmatpush1.msra.mxu0 0.0
    %1506 = vmatprep.subr.mxu0 0.0
    %1507 = vmatpush1.msra.mxu0 0.0
    %1508 = vmatprep.subr.mxu0 0.0
    %1509 = vmatpush1.msra.mxu0 0.0
    %1510 = vmatprep.subr.mxu0 0.0
    %1511 = vmatpush1.msra.mxu0 0.0
    %1512 = vmatprep.subr.mxu0 0.0
    %1513 = vmatpush1.msra.mxu0 0.0
    %1514 = vmatprep.subr.mxu0 0.0
    %1515 = vmatpush1.msra.mxu0 0.0
    %1516 = vmatprep.subr.mxu0 0.0
    %1517 = vmatpush1.msra.mxu0 0.0
    %1518 = vmatprep.subr.mxu0 0.0
    %1519 = vmatpush1.msra.mxu0 0.0
    %1520 = vmatprep.subr.mxu0 0.0
    %1521 = vmatpush1.msra.mxu0 0.0
    %1522 = vmatprep.subr.mxu0 0.0
    %1523 = vmatpush1.msra.mxu0 0.0
    %1524 = vmatprep.subr.mxu0 0.0
    %1525 = vmatpush1.msra.mxu0 0.0
    %1526 = vmatprep.subr.mxu0 0.0
    %1527 = vmatpush1.msra.mxu0 0.0
    %1528 = vmatprep.subr.mxu0 0.0
    %1529 = vmatpush1.msra.mxu0 0.0
    %1530 = vmatprep.subr.mxu0 0.0
    %1531 = vmatpush1.msra.mxu0 0.0
    %1532 = vmatprep.subr.mxu0 0.0
    %1533 = vmatpush1.msra.mxu0 0.0
    %1534 = vmatprep.subr.mxu0 0.0
    %1535 = vmatpush1.msra.mxu0 0.0
    %1536 = vmatprep.subr.mxu0 0.0
    %1537 = vmatpush1.msra.mxu0 0.0
    %1538 = vmatprep.subr.mxu0 0.0
    %1539 = vmatpush1.msra.mxu0 0.0
    %1540 = vmatprep.subr.mxu0 0.0
    %1541 = vmatpush1.msra.mxu0 0.0
    %1542 = vmatprep.subr.mxu0 0.0
    %1543 = vmatpush1.msra.mxu0 0.0
    %1544 = vmatprep.subr.mxu0 0.0
    %1545 = vmatpush1.msra.mxu0 0.0
    %1546 = vmatprep.subr.mxu0 0.0
    %1547 = vmatpush1.msra.mxu0 0.0
    %1548 = vmatprep.subr.mxu0 0.0
    %1549 = vmatpush1.msra.mxu0 0.0
    %1550 = vmatprep.mubr.f32.mxu0 0.0
    %1551 = vmatmul.mubr.f32.gmra.mrb[0].mxu0 %v1413
    %v1552 = vpop.f32.mrb[0].mxu0
    %v1553 = vadd.f32 %v1402, %v1552
    %v1554 = vpop.f32.mrb[0].mxu0
    %v1555 = vadd.f32 %v1406, %v1554
    %1556 = vdwg.mxu0
    %vm1557 = vcmp.ge.f32.partialorder %v1482, 0.0
    %vm1558 = vcmp.ge.f32.partialorder %v1484, 0.0
    %vm1559 = vcmp.ge.f32.partialorder %v1553, 0.0
    %vm1560 = vcmp.ge.f32.partialorder %v1555, 0.0
    %v1561 = vmul.f32 %v1482, 0.22916667
    %v1562 = vmul.f32 %v1484, 0.22916667
    %v1563 = vmul.f32 %v1553, 0.22916667
    %v1564 = vmul.f32 %v1555, 0.22916667
    %v1565 = vsel %vm1557, %v1482, %v1561
    %v1566 = vsel %vm1558, %v1484, %v1562
    %v1567 = vsel %vm1559, %v1553, %v1563
    %v1568 = vsel %vm1560, %v1555, %v1564
    %v1569 = vld [vmem:[#allocation8] sm:$0xff]
    %v1570 = vld [vmem:[#allocation8 + $0x8] sm:$0xff]
    %v1571 = vld [vmem:[#allocation8 + $0x10] sm:$0xff]
    %v1572 = vld [vmem:[#allocation8 + $0x18] sm:$0xff]
    %v1573 = vld [vmem:[#allocation8 + $0x20] sm:$0xff]
    %v1574 = vld [vmem:[#allocation8 + $0x28] sm:$0xff]
    %v1575 = vld [vmem:[#allocation8 + $0x30] sm:$0xff]
    %v1576 = vld [vmem:[#allocation8 + $0x38] sm:$0xff]
    %v1577 = vld [vmem:[#allocation8 + $0x40] sm:$0xff]
    %v1578 = vld [vmem:[#allocation8 + $0x48] sm:$0xff]
    %v1579 = vld [vmem:[#allocation8 + $0x50] sm:$0xff]
    %v1580 = vld [vmem:[#allocation8 + $0x58] sm:$0xff]
    %v1581 = vld [vmem:[#allocation8 + $0x60] sm:$0xff]
    %v1582 = vld [vmem:[#allocation8 + $0x68] sm:$0xff]
    %v1583 = vld [vmem:[#allocation8 + $0x70] sm:$0xff]
    %v1584 = vld [vmem:[#allocation8 + $0x78] sm:$0xff]
    %v1585 = vld [vmem:[#allocation8 + $0x80] sm:$0xff]
    %v1586 = vld [vmem:[#allocation8 + $0x88] sm:$0xff]
    %v1587 = vld [vmem:[#allocation8 + $0x90] sm:$0xff]
    %v1588 = vld [vmem:[#allocation8 + $0x98] sm:$0xff]
    %v1589 = vld [vmem:[#allocation8 + $0xa0] sm:$0xff]
    %v1590 = vld [vmem:[#allocation8 + $0xa8] sm:$0xff]
    %v1591 = vld [vmem:[#allocation8 + $0xb0] sm:$0xff]
    %v1592 = vld [vmem:[#allocation8 + $0xb8] sm:$0xff]
    %v1593 = vld [vmem:[#allocation8 + $0xc0] sm:$0xff]
    %v1594 = vld [vmem:[#allocation8 + $0xc8] sm:$0xff]
    %v1595 = vld [vmem:[#allocation8 + $0xd0] sm:$0xff]
    %v1596 = vld [vmem:[#allocation8 + $0xd8] sm:$0xff]
    %v1597 = vld [vmem:[#allocation8 + $0xe0] sm:$0xff]
    %v1598 = vld [vmem:[#allocation8 + $0xe8] sm:$0xff]
    %v1599 = vld [vmem:[#allocation8 + $0xf0] sm:$0xff]
    %v1600 = vld [vmem:[#allocation8 + $0xf8] sm:$0xff]
    %v1601 = vld [vmem:[#allocation8 + $0x100] sm:$0xff]
    %v1602 = vld [vmem:[#allocation8 + $0x108] sm:$0xff]
    %v1603 = vld [vmem:[#allocation8 + $0x110] sm:$0xff]
    %v1604 = vld [vmem:[#allocation8 + $0x118] sm:$0xff]
    %v1605 = vld [vmem:[#allocation8 + $0x120] sm:$0xff]
    %v1606 = vld [vmem:[#allocation8 + $0x128] sm:$0xff]
    %v1607 = vld [vmem:[#allocation8 + $0x130] sm:$0xff]
    %v1608 = vld [vmem:[#allocation8 + $0x138] sm:$0xff]
    %v1609 = vld [vmem:[#allocation8 + $0x140] sm:$0xff]
    %v1610 = vld [vmem:[#allocation8 + $0x148] sm:$0xff]
    %v1611 = vld [vmem:[#allocation8 + $0x150] sm:$0xff]
    %v1612 = vld [vmem:[#allocation8 + $0x158] sm:$0xff]
    %v1613 = vld [vmem:[#allocation8 + $0x160] sm:$0xff]
    %v1614 = vld [vmem:[#allocation8 + $0x168] sm:$0xff]
    %v1615 = vld [vmem:[#allocation8 + $0x170] sm:$0xff]
    %v1616 = vld [vmem:[#allocation8 + $0x178] sm:$0xff]
    %v1617 = vld [vmem:[#allocation8 + $0x180] sm:$0xff]
    %v1618 = vld [vmem:[#allocation8 + $0x188] sm:$0xff]
    %v1619 = vld [vmem:[#allocation8 + $0x190] sm:$0xff]
    %v1620 = vld [vmem:[#allocation8 + $0x198] sm:$0xff]
    %v1621 = vld [vmem:[#allocation8 + $0x1a0] sm:$0xff]
    %v1622 = vld [vmem:[#allocation8 + $0x1a8] sm:$0xff]
    %v1623 = vld [vmem:[#allocation8 + $0x1b0] sm:$0xff]
    %v1624 = vld [vmem:[#allocation8 + $0x1b8] sm:$0xff]
    %v1625 = vld [vmem:[#allocation8 + $0x1c0] sm:$0xff]
    %v1626 = vld [vmem:[#allocation8 + $0x1c8] sm:$0xff]
    %v1627 = vld [vmem:[#allocation8 + $0x1d0] sm:$0xff]
    %v1628 = vld [vmem:[#allocation8 + $0x1d8] sm:$0xff]
    %v1629 = vld [vmem:[#allocation8 + $0x1e0] sm:$0xff]
    %v1630 = vld [vmem:[#allocation8 + $0x1e8] sm:$0xff]
    %v1631 = vld [vmem:[#allocation8 + $0x1f0] sm:$0xff]
    %v1632 = vld [vmem:[#allocation8 + $0x1f8] sm:$0xff]
    %v1633 = vld [vmem:[%s9] sm:$0x1]
    %v1635 = vlaneseq
    %v1636 = vshrl.u32 %v1635, 7
    %v1637 = vsub.s32 0, %v1636
    %v1638 = vrot.slane %v1633, %v1637
    %1640 = vmatprep.subr.mxu0 0.0
    %1641 = vmatpush1.msra.mxu0 %v1569
    %1642 = vmatprep.subr.mxu0 0.0
    %1643 = vmatpush1.msra.mxu0 %v1570
    %1644 = vmatprep.subr.mxu0 0.0
    %1645 = vmatpush1.msra.mxu0 %v1571
    %1646 = vmatprep.subr.mxu0 0.0
    %1647 = vmatpush1.msra.mxu0 %v1572
    %1648 = vmatprep.subr.mxu0 0.0
    %1649 = vmatpush1.msra.mxu0 %v1573
    %1650 = vmatprep.subr.mxu0 0.0
    %1651 = vmatpush1.msra.mxu0 %v1574
    %1652 = vmatprep.subr.mxu0 0.0
    %1653 = vmatpush1.msra.mxu0 %v1575
    %1654 = vmatprep.subr.mxu0 0.0
    %1655 = vmatpush1.msra.mxu0 %v1576
    %1656 = vmatprep.subr.mxu0 0.0
    %1657 = vmatpush1.msra.mxu0 %v1577
    %1658 = vmatprep.subr.mxu0 0.0
    %1659 = vmatpush1.msra.mxu0 %v1578
    %1660 = vmatprep.subr.mxu0 0.0
    %1661 = vmatpush1.msra.mxu0 %v1579
    %1662 = vmatprep.subr.mxu0 0.0
    %1663 = vmatpush1.msra.mxu0 %v1580
    %1664 = vmatprep.subr.mxu0 0.0
    %1665 = vmatpush1.msra.mxu0 %v1581
    %1666 = vmatprep.subr.mxu0 0.0
    %1667 = vmatpush1.msra.mxu0 %v1582
    %1668 = vmatprep.subr.mxu0 0.0
    %1669 = vmatpush1.msra.mxu0 %v1583
    %1670 = vmatprep.subr.mxu0 0.0
    %1671 = vmatpush1.msra.mxu0 %v1584
    %1672 = vmatprep.subr.mxu0 0.0
    %1673 = vmatpush1.msra.mxu0 %v1585
    %1674 = vmatprep.subr.mxu0 0.0
    %1675 = vmatpush1.msra.mxu0 %v1586
    %1676 = vmatprep.subr.mxu0 0.0
    %1677 = vmatpush1.msra.mxu0 %v1587
    %1678 = vmatprep.subr.mxu0 0.0
    %1679 = vmatpush1.msra.mxu0 %v1588
    %1680 = vmatprep.subr.mxu0 0.0
    %1681 = vmatpush1.msra.mxu0 %v1589
    %1682 = vmatprep.subr.mxu0 0.0
    %1683 = vmatpush1.msra.mxu0 %v1590
    %1684 = vmatprep.subr.mxu0 0.0
    %1685 = vmatpush1.msra.mxu0 %v1591
    %1686 = vmatprep.subr.mxu0 0.0
    %1687 = vmatpush1.msra.mxu0 %v1592
    %1688 = vmatprep.subr.mxu0 0.0
    %1689 = vmatpush1.msra.mxu0 %v1593
    %1690 = vmatprep.subr.mxu0 0.0
    %1691 = vmatpush1.msra.mxu0 %v1594
    %1692 = vmatprep.subr.mxu0 0.0
    %1693 = vmatpush1.msra.mxu0 %v1595
    %1694 = vmatprep.subr.mxu0 0.0
    %1695 = vmatpush1.msra.mxu0 %v1596
    %1696 = vmatprep.subr.mxu0 0.0
    %1697 = vmatpush1.msra.mxu0 %v1597
    %1698 = vmatprep.subr.mxu0 0.0
    %1699 = vmatpush1.msra.mxu0 %v1598
    %1700 = vmatprep.subr.mxu0 0.0
    %1701 = vmatpush1.msra.mxu0 %v1599
    %1702 = vmatprep.subr.mxu0 0.0
    %1703 = vmatpush1.msra.mxu0 %v1600
    %1704 = vmatprep.mubr.f32.mxu0 %v1566
    %1705 = vmatmul.mubr.f32.gmra.mrb[0].mxu0 %v1565
    %v1706 = vpop.f32.mrb[0].mxu0
    %v1707 = vadd.f32 %v1638, %v1706
    %v1708 = vpop.f32.mrb[0].mxu0
    %1709 = vdwg.mxu0
    %1710 = vmatprep.subr.mxu0 0.0
    %1711 = vmatpush1.msra.mxu0 %v1601
    %1712 = vmatprep.subr.mxu0 0.0
    %1713 = vmatpush1.msra.mxu0 %v1602
    %1714 = vmatprep.subr.mxu0 0.0
    %1715 = vmatpush1.msra.mxu0 %v1603
    %1716 = vmatprep.subr.mxu0 0.0
    %1717 = vmatpush1.msra.mxu0 %v1604
    %1718 = vmatprep.subr.mxu0 0.0
    %1719 = vmatpush1.msra.mxu0 %v1605
    %1720 = vmatprep.subr.mxu0 0.0
    %1721 = vmatpush1.msra.mxu0 %v1606
    %1722 = vmatprep.subr.mxu0 0.0
    %1723 = vmatpush1.msra.mxu0 %v1607
    %1724 = vmatprep.subr.mxu0 0.0
    %1725 = vmatpush1.msra.mxu0 %v1608
    %1726 = vmatprep.subr.mxu0 0.0
    %1727 = vmatpush1.msra.mxu0 %v1609
    %1728 = vmatprep.subr.mxu0 0.0
    %1729 = vmatpush1.msra.mxu0 %v1610
    %1730 = vmatprep.subr.mxu0 0.0
    %1731 = vmatpush1.msra.mxu0 %v1611
    %1732 = vmatprep.subr.mxu0 0.0
    %1733 = vmatpush1.msra.mxu0 %v1612
    %1734 = vmatprep.subr.mxu0 0.0
    %1735 = vmatpush1.msra.mxu0 %v1613
    %1736 = vmatprep.subr.mxu0 0.0
    %1737 = vmatpush1.msra.mxu0 %v1614
    %1738 = vmatprep.subr.mxu0 0.0
    %1739 = vmatpush1.msra.mxu0 %v1615
    %1740 = vmatprep.subr.mxu0 0.0
    %1741 = vmatpush1.msra.mxu0 %v1616
    %1742 = vmatprep.subr.mxu0 0.0
    %1743 = vmatpush1.msra.mxu0 %v1617
    %1744 = vmatprep.subr.mxu0 0.0
    %1745 = vmatpush1.msra.mxu0 %v1618
    %1746 = vmatprep.subr.mxu0 0.0
    %1747 = vmatpush1.msra.mxu0 %v1619
    %1748 = vmatprep.subr.mxu0 0.0
    %1749 = vmatpush1.msra.mxu0 %v1620
    %1750 = vmatprep.subr.mxu0 0.0
    %1751 = vmatpush1.msra.mxu0 %v1621
    %1752 = vmatprep.subr.mxu0 0.0
    %1753 = vmatpush1.msra.mxu0 %v1622
    %1754 = vmatprep.subr.mxu0 0.0
    %1755 = vmatpush1.msra.mxu0 %v1623
    %1756 = vmatprep.subr.mxu0 0.0
    %1757 = vmatpush1.msra.mxu0 %v1624
    %1758 = vmatprep.subr.mxu0 0.0
    %1759 = vmatpush1.msra.mxu0 %v1625
    %1760 = vmatprep.subr.mxu0 0.0
    %1761 = vmatpush1.msra.mxu0 %v1626
    %1762 = vmatprep.subr.mxu0 0.0
    %1763 = vmatpush1.msra.mxu0 %v1627
    %1764 = vmatprep.subr.mxu0 0.0
    %1765 = vmatpush1.msra.mxu0 %v1628
    %1766 = vmatprep.subr.mxu0 0.0
    %1767 = vmatpush1.msra.mxu0 %v1629
    %1768 = vmatprep.subr.mxu0 0.0
    %1769 = vmatpush1.msra.mxu0 %v1630
    %1770 = vmatprep.subr.mxu0 0.0
    %1771 = vmatpush1.msra.mxu0 %v1631
    %1772 = vmatprep.subr.mxu0 0.0
    %1773 = vmatpush1.msra.mxu0 %v1632
    %1774 = vmatprep.mubr.f32.mxu0 %v1568
    %1775 = vmatmul.mubr.f32.gmra.mrb[0].mxu0 %v1567
    %v1776 = vpop.f32.mrb[0].mxu0
    %v1777 = vadd.f32 %v1707, %v1776
    %v1778 = vpop.f32.mrb[0].mxu0
    %1779 = vdwg.mxu0
    %v1780 = vtanh.pop %v1777
    %v1781 = vld [vmem:[%s10] sm:$0xff]
    %v1782 = vld [vmem:[%s10 + $0x8] sm:$0xff]
    %v1783 = vld [vmem:[%s10 + $0x10] sm:$0xff]
    %v1784 = vld [vmem:[%s10 + $0x18] sm:$0xff]
    %v1785 = vld [vmem:[%s10 + $0x20] sm:$0xff]
    %v1786 = vld [vmem:[%s10 + $0x28] sm:$0xff]
    %v1787 = vld [vmem:[%s10 + $0x30] sm:$0xff]
    %v1788 = vld [vmem:[%s10 + $0x38] sm:$0xff]
    %v1789 = vld [vmem:[%s10 + $0x40] sm:$0xff]
    %v1790 = vld [vmem:[%s10 + $0x48] sm:$0xff]
    %v1791 = vld [vmem:[%s10 + $0x50] sm:$0xff]
    %v1792 = vld [vmem:[%s10 + $0x58] sm:$0xff]
    %v1793 = vld [vmem:[%s10 + $0x60] sm:$0xff]
    %v1794 = vld [vmem:[%s10 + $0x68] sm:$0xff]
    %v1795 = vld [vmem:[%s10 + $0x70] sm:$0xff]
    %v1796 = vld [vmem:[%s10 + $0x78] sm:$0xff]
    %v1797 = vld [vmem:[%s10 + $0x80] sm:$0xff]
    %v1798 = vld [vmem:[%s10 + $0x88] sm:$0xff]
    %v1799 = vld [vmem:[%s10 + $0x90] sm:$0xff]
    %v1800 = vld [vmem:[%s10 + $0x98] sm:$0xff]
    %v1801 = vld [vmem:[%s10 + $0xa0] sm:$0xff]
    %v1802 = vld [vmem:[%s10 + $0xa8] sm:$0xff]
    %v1803 = vld [vmem:[%s10 + $0xb0] sm:$0xff]
    %v1804 = vld [vmem:[%s10 + $0xb8] sm:$0xff]
    %v1805 = vld [vmem:[%s10 + $0xc0] sm:$0xff]
    %v1806 = vld [vmem:[%s10 + $0xc8] sm:$0xff]
    %v1807 = vld [vmem:[%s10 + $0xd0] sm:$0xff]
    %v1808 = vld [vmem:[%s10 + $0xd8] sm:$0xff]
    %v1809 = vld [vmem:[%s10 + $0xe0] sm:$0xff]
    %v1810 = vld [vmem:[%s10 + $0xe8] sm:$0xff]
    %v1811 = vld [vmem:[%s10 + $0xf0] sm:$0xff]
    %v1812 = vld [vmem:[%s10 + $0xf8] sm:$0xff]
    %v1813 = vld [vmem:[%s10 + $0x100] sm:$0xff]
    %v1814 = vld [vmem:[%s10 + $0x108] sm:$0xff]
    %v1815 = vld [vmem:[%s10 + $0x110] sm:$0xff]
    %v1816 = vld [vmem:[%s10 + $0x118] sm:$0xff]
    %v1817 = vld [vmem:[%s10 + $0x120] sm:$0xff]
    %v1818 = vld [vmem:[%s10 + $0x128] sm:$0xff]
    %v1819 = vld [vmem:[%s10 + $0x130] sm:$0xff]
    %v1820 = vld [vmem:[%s10 + $0x138] sm:$0xff]
    %v1821 = vld [vmem:[%s10 + $0x140] sm:$0xff]
    %v1822 = vld [vmem:[%s10 + $0x148] sm:$0xff]
    %v1823 = vld [vmem:[%s10 + $0x150] sm:$0xff]
    %v1824 = vld [vmem:[%s10 + $0x158] sm:$0xff]
    %v1825 = vld [vmem:[%s10 + $0x160] sm:$0xff]
    %v1826 = vld [vmem:[%s10 + $0x168] sm:$0xff]
    %v1827 = vld [vmem:[%s10 + $0x170] sm:$0xff]
    %v1828 = vld [vmem:[%s10 + $0x178] sm:$0xff]
    %v1829 = vld [vmem:[%s10 + $0x180] sm:$0xff]
    %v1830 = vld [vmem:[%s10 + $0x188] sm:$0xff]
    %v1831 = vld [vmem:[%s10 + $0x190] sm:$0xff]
    %v1832 = vld [vmem:[%s10 + $0x198] sm:$0xff]
    %v1833 = vld [vmem:[%s10 + $0x1a0] sm:$0xff]
    %v1834 = vld [vmem:[%s10 + $0x1a8] sm:$0xff]
    %v1835 = vld [vmem:[%s10 + $0x1b0] sm:$0xff]
    %v1836 = vld [vmem:[%s10 + $0x1b8] sm:$0xff]
    %v1837 = vld [vmem:[%s10 + $0x1c0] sm:$0xff]
    %v1838 = vld [vmem:[%s10 + $0x1c8] sm:$0xff]
    %v1839 = vld [vmem:[%s10 + $0x1d0] sm:$0xff]
    %v1840 = vld [vmem:[%s10 + $0x1d8] sm:$0xff]
    %v1841 = vld [vmem:[%s10 + $0x1e0] sm:$0xff]
    %v1842 = vld [vmem:[%s10 + $0x1e8] sm:$0xff]
    %v1843 = vld [vmem:[%s10 + $0x1f0] sm:$0xff]
    %v1844 = vld [vmem:[%s10 + $0x1f8] sm:$0xff]
    %v1845 = vld [vmem:[%s11] sm:$0xff]
    %v1846 = vld [vmem:[%s11 + $0x8] sm:$0xff]
    %v1847 = vld [vmem:[%s11 + $0x10] sm:$0xff]
    %v1848 = vld [vmem:[%s11 + $0x18] sm:$0xff]
    %vm1849 = vcmask 261120
    %v1851 = vsel %vm1849, %v1780, 0
    %1853 = vmatprep.subr.mxu0 0.0
    %1854 = vmatpush1.msra.mxu0 %v1845
    %1855 = vmatprep.subr.mxu0 0.0
    %1856 = vmatpush1.msra.mxu0 %v1846
    %1857 = vmatprep.subr.mxu0 0.0
    %1858 = vmatpush1.msra.mxu0 %v1847
    %1859 = vmatprep.subr.mxu0 0.0
    %1860 = vmatpush1.msra.mxu0 %v1848
    %1861 = vmatprep.subr.mxu0 0.0
    %1862 = vmatpush1.msra.mxu0 0.0
    %1863 = vmatprep.subr.mxu0 0.0
    %1864 = vmatpush1.msra.mxu0 0.0
    %1865 = vmatprep.subr.mxu0 0.0
    %1866 = vmatpush1.msra.mxu0 0.0
    %1867 = vmatprep.subr.mxu0 0.0
    %1868 = vmatpush1.msra.mxu0 0.0
    %1869 = vmatprep.subr.mxu0 0.0
    %1870 = vmatpush1.msra.mxu0 0.0
    %1871 = vmatprep.subr.mxu0 0.0
    %1872 = vmatpush1.msra.mxu0 0.0
    %1873 = vmatprep.subr.mxu0 0.0
    %1874 = vmatpush1.msra.mxu0 0.0
    %1875 = vmatprep.subr.mxu0 0.0
    %1876 = vmatpush1.msra.mxu0 0.0
    %1877 = vmatprep.subr.mxu0 0.0
    %1878 = vmatpush1.msra.mxu0 0.0
    %1879 = vmatprep.subr.mxu0 0.0
    %1880 = vmatpush1.msra.mxu0 0.0
    %1881 = vmatprep.subr.mxu0 0.0
    %1882 = vmatpush1.msra.mxu0 0.0
    %1883 = vmatprep.subr.mxu0 0.0
    %1884 = vmatpush1.msra.mxu0 0.0
    %1885 = vmatprep.subr.mxu0 0.0
    %1886 = vmatpush1.msra.mxu0 0.0
    %1887 = vmatprep.subr.mxu0 0.0
    %1888 = vmatpush1.msra.mxu0 0.0
    %1889 = vmatprep.subr.mxu0 0.0
    %1890 = vmatpush1.msra.mxu0 0.0
    %1891 = vmatprep.subr.mxu0 0.0
    %1892 = vmatpush1.msra.mxu0 0.0
    %1893 = vmatprep.subr.mxu0 0.0
    %1894 = vmatpush1.msra.mxu0 0.0
    %1895 = vmatprep.subr.mxu0 0.0
    %1896 = vmatpush1.msra.mxu0 0.0
    %1897 = vmatprep.subr.mxu0 0.0
    %1898 = vmatpush1.msra.mxu0 0.0
    %1899 = vmatprep.subr.mxu0 0.0
    %1900 = vmatpush1.msra.mxu0 0.0
    %1901 = vmatprep.subr.mxu0 0.0
    %1902 = vmatpush1.msra.mxu0 0.0
    %1903 = vmatprep.subr.mxu0 0.0
    %1904 = vmatpush1.msra.mxu0 0.0
    %1905 = vmatprep.subr.mxu0 0.0
    %1906 = vmatpush1.msra.mxu0 0.0
    %1907 = vmatprep.subr.mxu0 0.0
    %1908 = vmatpush1.msra.mxu0 0.0
    %1909 = vmatprep.subr.mxu0 0.0
    %1910 = vmatpush1.msra.mxu0 0.0
    %1911 = vmatprep.subr.mxu0 0.0
    %1912 = vmatpush1.msra.mxu0 0.0
    %1913 = vmatprep.subr.mxu0 0.0
    %1914 = vmatpush1.msra.mxu0 0.0
    %1915 = vmatprep.subr.mxu0 0.0
    %1916 = vmatpush1.msra.mxu0 0.0
    %1917 = vmatprep.mubr.f32.mxu0 0.0
    %1918 = vmatmul.mubr.f32.gmra.mrb[0].mxu0 %v1851
    %v1919 = vpop.f32.mrb[0].mxu0
    %v1920 = vadd.f32 0.0, %v1919
    %v1921 = vpop.f32.mrb[0].mxu0
    %1922 = vdwg.mxu0
    %1923 = vmatprep.subr.mxu0 0.0
    %1924 = vmatpush1.msra.mxu0 %v1781
    %1925 = vmatprep.subr.mxu0 0.0
    %1926 = vmatpush1.msra.mxu0 %v1782
    %1927 = vmatprep.subr.mxu0 0.0
    %1928 = vmatpush1.msra.mxu0 %v1783
    %1929 = vmatprep.subr.mxu0 0.0
    %1930 = vmatpush1.msra.mxu0 %v1784
    %1931 = vmatprep.subr.mxu0 0.0
    %1932 = vmatpush1.msra.mxu0 %v1785
    %1933 = vmatprep.subr.mxu0 0.0
    %1934 = vmatpush1.msra.mxu0 %v1786
    %1935 = vmatprep.subr.mxu0 0.0
    %1936 = vmatpush1.msra.mxu0 %v1787
    %1937 = vmatprep.subr.mxu0 0.0
    %1938 = vmatpush1.msra.mxu0 %v1788
    %1939 = vmatprep.subr.mxu0 0.0
    %1940 = vmatpush1.msra.mxu0 %v1789
    %1941 = vmatprep.subr.mxu0 0.0
    %1942 = vmatpush1.msra.mxu0 %v1790
    %1943 = vmatprep.subr.mxu0 0.0
    %1944 = vmatpush1.msra.mxu0 %v1791
    %1945 = vmatprep.subr.mxu0 0.0
    %1946 = vmatpush1.msra.mxu0 %v1792
    %1947 = vmatprep.subr.mxu0 0.0
    %1948 = vmatpush1.msra.mxu0 %v1793
    %1949 = vmatprep.subr.mxu0 0.0
    %1950 = vmatpush1.msra.mxu0 %v1794
    %1951 = vmatprep.subr.mxu0 0.0
    %1952 = vmatpush1.msra.mxu0 %v1795
    %1953 = vmatprep.subr.mxu0 0.0
    %1954 = vmatpush1.msra.mxu0 %v1796
    %1955 = vmatprep.subr.mxu0 0.0
    %1956 = vmatpush1.msra.mxu0 %v1797
    %1957 = vmatprep.subr.mxu0 0.0
    %1958 = vmatpush1.msra.mxu0 %v1798
    %1959 = vmatprep.subr.mxu0 0.0
    %1960 = vmatpush1.msra.mxu0 %v1799
    %1961 = vmatprep.subr.mxu0 0.0
    %1962 = vmatpush1.msra.mxu0 %v1800
    %1963 = vmatprep.subr.mxu0 0.0
    %1964 = vmatpush1.msra.mxu0 %v1801
    %1965 = vmatprep.subr.mxu0 0.0
    %1966 = vmatpush1.msra.mxu0 %v1802
    %1967 = vmatprep.subr.mxu0 0.0
    %1968 = vmatpush1.msra.mxu0 %v1803
    %1969 = vmatprep.subr.mxu0 0.0
    %1970 = vmatpush1.msra.mxu0 %v1804
    %1971 = vmatprep.subr.mxu0 0.0
    %1972 = vmatpush1.msra.mxu0 %v1805
    %1973 = vmatprep.subr.mxu0 0.0
    %1974 = vmatpush1.msra.mxu0 %v1806
    %1975 = vmatprep.subr.mxu0 0.0
    %1976 = vmatpush1.msra.mxu0 %v1807
    %1977 = vmatprep.subr.mxu0 0.0
    %1978 = vmatpush1.msra.mxu0 %v1808
    %1979 = vmatprep.subr.mxu0 0.0
    %1980 = vmatpush1.msra.mxu0 %v1809
    %1981 = vmatprep.subr.mxu0 0.0
    %1982 = vmatpush1.msra.mxu0 %v1810
    %1983 = vmatprep.subr.mxu0 0.0
    %1984 = vmatpush1.msra.mxu0 %v1811
    %1985 = vmatprep.subr.mxu0 0.0
    %1986 = vmatpush1.msra.mxu0 %v1812
    %1987 = vmatprep.mubr.f32.mxu0 %v1566
    %1988 = vmatmul.mubr.f32.gmra.mrb[0].mxu0 %v1565
    %v1989 = vpop.f32.mrb[0].mxu0
    %v1990 = vadd.f32 %v1920, %v1989
    %v1991 = vpop.f32.mrb[0].mxu0
    %1992 = vdwg.mxu0
    %1993 = vmatprep.subr.mxu0 0.0
    %1994 = vmatpush1.msra.mxu0 %v1813
    %1995 = vmatprep.subr.mxu0 0.0
    %1996 = vmatpush1.msra.mxu0 %v1814
    %1997 = vmatprep.subr.mxu0 0.0
    %1998 = vmatpush1.msra.mxu0 %v1815
    %1999 = vmatprep.subr.mxu0 0.0
    %2000 = vmatpush1.msra.mxu0 %v1816
    %2001 = vmatprep.subr.mxu0 0.0
    %2002 = vmatpush1.msra.mxu0 %v1817
    %2003 = vmatprep.subr.mxu0 0.0
    %2004 = vmatpush1.msra.mxu0 %v1818
    %2005 = vmatprep.subr.mxu0 0.0
    %2006 = vmatpush1.msra.mxu0 %v1819
    %2007 = vmatprep.subr.mxu0 0.0
    %2008 = vmatpush1.msra.mxu0 %v1820
    %2009 = vmatprep.subr.mxu0 0.0
    %2010 = vmatpush1.msra.mxu0 %v1821
    %2011 = vmatprep.subr.mxu0 0.0
    %2012 = vmatpush1.msra.mxu0 %v1822
    %2013 = vmatprep.subr.mxu0 0.0
    %2014 = vmatpush1.msra.mxu0 %v1823
    %2015 = vmatprep.subr.mxu0 0.0
    %2016 = vmatpush1.msra.mxu0 %v1824
    %2017 = vmatprep.subr.mxu0 0.0
    %2018 = vmatpush1.msra.mxu0 %v1825
    %2019 = vmatprep.subr.mxu0 0.0
    %2020 = vmatpush1.msra.mxu0 %v1826
    %2021 = vmatprep.subr.mxu0 0.0
    %2022 = vmatpush1.msra.mxu0 %v1827
    %2023 = vmatprep.subr.mxu0 0.0
    %2024 = vmatpush1.msra.mxu0 %v1828
    %2025 = vmatprep.subr.mxu0 0.0
    %2026 = vmatpush1.msra.mxu0 %v1829
    %2027 = vmatprep.subr.mxu0 0.0
    %2028 = vmatpush1.msra.mxu0 %v1830
    %2029 = vmatprep.subr.mxu0 0.0
    %2030 = vmatpush1.msra.mxu0 %v1831
    %2031 = vmatprep.subr.mxu0 0.0
    %2032 = vmatpush1.msra.mxu0 %v1832
    %2033 = vmatprep.subr.mxu0 0.0
    %2034 = vmatpush1.msra.mxu0 %v1833
    %2035 = vmatprep.subr.mxu0 0.0
    %2036 = vmatpush1.msra.mxu0 %v1834
    %2037 = vmatprep.subr.mxu0 0.0
    %2038 = vmatpush1.msra.mxu0 %v1835
    %2039 = vmatprep.subr.mxu0 0.0
    %2040 = vmatpush1.msra.mxu0 %v1836
    %2041 = vmatprep.subr.mxu0 0.0
    %2042 = vmatpush1.msra.mxu0 %v1837
    %2043 = vmatprep.subr.mxu0 0.0
    %2044 = vmatpush1.msra.mxu0 %v1838
    %2045 = vmatprep.subr.mxu0 0.0
    %2046 = vmatpush1.msra.mxu0 %v1839
    %2047 = vmatprep.subr.mxu0 0.0
    %2048 = vmatpush1.msra.mxu0 %v1840
    %2049 = vmatprep.subr.mxu0 0.0
    %2050 = vmatpush1.msra.mxu0 %v1841
    %2051 = vmatprep.subr.mxu0 0.0
    %2052 = vmatpush1.msra.mxu0 %v1842
    %2053 = vmatprep.subr.mxu0 0.0
    %2054 = vmatpush1.msra.mxu0 %v1843
    %2055 = vmatprep.subr.mxu0 0.0
    %2056 = vmatpush1.msra.mxu0 %v1844
    %2057 = vmatprep.mubr.f32.mxu0 %v1568
    %2058 = vmatmul.mubr.f32.gmra.mrb[0].mxu0 %v1567
    %v2059 = vpop.f32.mrb[0].mxu0
    %v2060 = vadd.f32 %v1990, %v2059
    %v2061 = vpop.f32.mrb[0].mxu0
    %2062 = vdwg.mxu0
    %v2063 = vld [vmem:[%s12] sm:$0x1]
    %v2065 = vlaneseq
    %v2066 = vshrl.u32 %v2065, 7
    %v2067 = vsub.s32 0, %v2066
    %v2068 = vrot.slane %v2063, %v2067
    %v2070 = vadd.f32 %v2060, %v2068
    %vm2071 = vcmask 130048
    %2072 = vst.msk [vmem:[#allocation9] sm:$0xff] %vm2071, %v2070
    // Predicated region
    $region66: #{_forward_impl.1} parent=1 // pred_check
      _
    $region67: #{_forward_impl.1} parent=1 // pred_check_branch
      %2074 = sbr.rel (0) target = $region69
    $region68: #{_forward_impl.1} parent=1 // pred_region
      %s2076 = ssub.s32 128, 128
      %2077 = vsyncadd [#allocation5], %s2076
      %s2079 = sshll.u32 [#allocation9], 4
      %s2080 = int_to_ptr.vmem [resolvable:$true] %s2079
      %2082 = dma.vmem_to_hbm [thread:$0]  %s2080, 128, %s13, [#allocation5]
    $region69: #{_forward_impl.1} parent=1 // pred_fallthru
      _
    // Predicated region
    $region70: #{_forward_impl.1} parent=1 // pred_check
      _
    $region71: #{_forward_impl.1} parent=1 // pred_check_branch
      %2084 = sbr.rel (0) target = $region73
    $region72: #{_forward_impl.1} parent=1 // pred_region
      %2085 = dma.done [#allocation5], 128
    $region73: #{_forward_impl.1} parent=1 // pred_fallthru
      _
    %2086 = vsyncpa [#allocation4], 1
    %2087 = vsyncpa [#allocation7], 1
    %2088 = vsyncpa [#allocation5], 1

</llo_original>
